<compile_context>
chip_gen: v7x
topology: tpu7x:2x2x1
jax: 0.10.0
libtpu: 0.0.40
codegen_flags: <defaults>
</compile_context>

<pallas_src>
import jax
import jax.numpy as jnp
from jax.experimental import pallas as pl
from jax.experimental.pallas import tpu as pltpu

LATENT_DIM = 100
H1 = 256
H2 = 512
OUT = 784            # 28 * 28
TM_MAX = 1024        # max batch-tile rows (VMEM use ~18 MiB at this size)


def _round_up(x, m):
    return ((x + m - 1) // m) * m


def _generator_kernel(z_ref, w1_ref, b1_ref, w2_ref, b2_ref, w3_ref, b3_ref,
                      out_ref):
    """One batch tile of the MLP: 3 bf16 MXU matmuls (f32 acc) + f32 VPU/EUP."""
    z = z_ref[...].astype(jnp.bfloat16)                        # (TM, 100)

    # Layer 1: Linear(100 -> 256) + ReLU   (K=100 masked by Mosaic)
    h1 = jnp.dot(z, w1_ref[...], preferred_element_type=jnp.float32)
    h1 = jnp.maximum(h1 + b1_ref[...], 0.0)

    # Layer 2: Linear(256 -> 512) + ReLU
    h2 = jnp.dot(h1.astype(jnp.bfloat16), w2_ref[...],
                 preferred_element_type=jnp.float32)
    h2 = jnp.maximum(h2 + b2_ref[...], 0.0)

    # Layer 3: Linear(512 -> 784) + Tanh, stored at real width (no padding).
    h3 = jnp.dot(h2.astype(jnp.bfloat16), w3_ref[...],
                 preferred_element_type=jnp.float32)
    out_ref[...] = jnp.tanh(h3 + b3_ref[...])


def pack_params(params):
    """One-time packing: bf16 weights for the MXU, f32 row-vector biases."""
    w1, b1, w2, b2, w3, b3 = params
    return (w1.astype(jnp.bfloat16), jnp.reshape(b1, (1, H1)).astype(jnp.float32),
            w2.astype(jnp.bfloat16), jnp.reshape(b2, (1, H2)).astype(jnp.float32),
            w3.astype(jnp.bfloat16), jnp.reshape(b3, (1, OUT)).astype(jnp.float32))


def _tiles(batch):
    """Balanced batch tiling; >=2 tiles once B>=16 so v7x uses both TCs."""
    b8 = _round_up(batch, 8)
    nb = pl.cdiv(b8, TM_MAX)
    if b8 >= 16:
        nb = max(nb, 2)
    tm = _round_up(pl.cdiv(b8, nb), 8)
    nb = pl.cdiv(b8, tm)
    return tm, nb, tm * nb


@jax.jit
def generator_forward(z, packed_params):
    """z: (B, LATENT_DIM) float32, packed_params from pack_params().
    Returns (B, 28, 28) float32."""
    w1, b1, w2, b2, w3, b3 = packed_params
    B = z.shape[0]
    tm, nb, b_pad = _tiles(B)

    # Row-pad z only when the batch isn't already tile-aligned.
    if b_pad != B:
        z_in = jnp.zeros((b_pad, LATENT_DIM), z.dtype).at[:B].set(z)
    else:
        z_in = z

    flops = 2 * b_pad * (LATENT_DIM * H1 + H1 * H2 + H2 * OUT)
    bytes_accessed = (
        (w1.size + w2.size + w3.size) * 2            # bf16 weights
        + (b1.size + b2.size + b3.size) * 4          # f32 biases
        + b_pad * (LATENT_DIM + OUT) * 4             # f32 z in / out
    )
    cost = pl.CostEstimate(flops=flops,
                           transcendentals=b_pad * OUT,
                           bytes_accessed=bytes_accessed)

    out_flat = pl.pallas_call(
        _generator_kernel,
        out_shape=jax.ShapeDtypeStruct((b_pad, OUT), jnp.float32),
        grid=(nb,),
        in_specs=[
            pl.BlockSpec((tm, LATENT_DIM), lambda i: (i, 0)),   # z tile
            pl.BlockSpec((LATENT_DIM, H1), lambda i: (0, 0)),   # w1 (resident)
            pl.BlockSpec((1, H1), lambda i: (0, 0)),            # b1
            pl.BlockSpec((H1, H2), lambda i: (0, 0)),           # w2
            pl.BlockSpec((1, H2), lambda i: (0, 0)),            # b2
            pl.BlockSpec((H2, OUT), lambda i: (0, 0)),          # w3
            pl.BlockSpec((1, OUT), lambda i: (0, 0)),           # b3
        ],
        out_specs=pl.BlockSpec((tm, OUT), lambda i: (i, 0)),
        compiler_params=pltpu.CompilerParams(
            dimension_semantics=("parallel",),          # megacore on v7x
            vmem_limit_bytes=40 * 1024 * 1024,          # ~18 MiB actual @ TM=1024
        ),
        cost_estimate=cost,
    )(z_in, w1, b1, w2, b2, w3, b3)

    if b_pad != B:
        out_flat = out_flat[:B]
    return out_flat.reshape(-1, 28, 28)                # pure bitcast


def init_generator_params(key, latent_dim=LATENT_DIM):
    """Deterministic init matching nn.Linear default (U(-1/sqrt(fan_in), +)).

    Weights are stored as (in_features, out_features) so y = x @ W + b matches
    PyTorch's x @ W.T with W of shape (out, in).
    """
    def linear(k, fan_in, fan_out):
        kw, kb = jax.random.split(k)
        bound = 1.0 / jnp.sqrt(jnp.float32(fan_in))
        w = jax.random.uniform(kw, (fan_in, fan_out), jnp.float32, -bound, bound)
        b = jax.random.uniform(kb, (1, fan_out), jnp.float32, -bound, bound)
        return w, b

    k1, k2, k3 = jax.random.split(key, 3)
    w1, b1 = linear(k1, latent_dim, H1)
    w2, b2 = linear(k2, H1, H2)
    w3, b3 = linear(k3, H2, OUT)
    return (w1, b1, w2, b2, w3, b3)


def _reference_forward(z, params):
    """Plain-JAX f32 reference of the PyTorch forward, for a sanity check."""
    w1, b1, w2, b2, w3, b3 = params
    h = jnp.maximum(z @ w1 + b1, 0.0)
    h = jnp.maximum(h @ w2 + b2, 0.0)
    return jnp.tanh(h @ w3 + b3).reshape(-1, 28, 28)


if __name__ == "__main__":
    key = jax.random.PRNGKey(0)
    k_params, k_z1, k_z2 = jax.random.split(key, 3)

    params = init_generator_params(k_params)
    packed = pack_params(params)     # one-time: bf16 weights, f32 row biases

    # Small batch (B=8): single aligned tile, no padding, no epilogue slice.
    z = jax.random.normal(k_z1, (8, LATENT_DIM), dtype=jnp.float32)
    out = jax.block_until_ready(generator_forward(z, packed))
    assert out.shape == (8, 28, 28), out.shape
    ref = _reference_forward(z, params)
    # bf16 MXU inputs -> looser tolerance than the pure-f32 version.
    assert jnp.allclose(out, ref, atol=2e-2, rtol=2e-2), (
        float(jnp.max(jnp.abs(out - ref))))

    # Ragged batch (B=19): exercises row padding + the two-tile (nb=2) path.
    z2 = jax.random.normal(k_z2, (19, LATENT_DIM), dtype=jnp.float32)
    out2 = jax.block_until_ready(generator_forward(z2, packed))
    assert out2.shape == (19, 28, 28), out2.shape
    ref2 = _reference_forward(z2, params)
    assert jnp.allclose(out2, ref2, atol=2e-2, rtol=2e-2), (
        float(jnp.max(jnp.abs(out2 - ref2))))

    print("KERNEL_OK")
</pallas_src>

<mosaic_0001>
module attributes {stable_mosaic.version = 11 : i64} {
  func.func @_generator_kernel(%arg0: i32, %arg1: memref<8x100xf32, #tpu.memory_space<vmem>>, %arg2: memref<100x256xbf16, #tpu.memory_space<vmem>>, %arg3: memref<1x256xf32, #tpu.memory_space<vmem>>, %arg4: memref<256x512xbf16, #tpu.memory_space<vmem>>, %arg5: memref<1x512xf32, #tpu.memory_space<vmem>>, %arg6: memref<512x784xbf16, #tpu.memory_space<vmem>>, %arg7: memref<1x784xf32, #tpu.memory_space<vmem>>, %arg8: memref<8x784xf32, #tpu.memory_space<vmem>>) attributes {dimension_semantics = [#tpu.dimension_semantics<parallel>], iteration_bounds = array<i64: 1>, scalar_prefetch = 0 : i64, scratch_operands = 0 : i64, tpu.core_type = #tpu.core_type<tc>, window_params = [{transform_indices = @transform_0, window_bounds = array<i64: 8, 100>}, {pipeline_mode = #tpu.pipeline_mode<synchronous>, transform_indices = @transform_1, window_bounds = array<i64: 100, 256>}, {pipeline_mode = #tpu.pipeline_mode<synchronous>, transform_indices = @transform_2, window_bounds = array<i64: 1, 256>}, {pipeline_mode = #tpu.pipeline_mode<synchronous>, transform_indices = @transform_3, window_bounds = array<i64: 256, 512>}, {pipeline_mode = #tpu.pipeline_mode<synchronous>, transform_indices = @transform_4, window_bounds = array<i64: 1, 512>}, {pipeline_mode = #tpu.pipeline_mode<synchronous>, transform_indices = @transform_5, window_bounds = array<i64: 512, 784>}, {pipeline_mode = #tpu.pipeline_mode<synchronous>, transform_indices = @transform_6, window_bounds = array<i64: 1, 784>}, {transform_indices = @transform_7, window_bounds = array<i64: 8, 784>}]} {
    %c0 = arith.constant 0 : index
    %c0_0 = arith.constant 0 : index
    %0 = vector.load %arg1[%c0, %c0_0] : memref<8x100xf32, #tpu.memory_space<vmem>>, vector<8x100xf32>
    %1 = arith.truncf %0 : vector<8x100xf32> to vector<8x100xbf16>
    %c0_1 = arith.constant 0 : index
    %c0_2 = arith.constant 0 : index
    %2 = vector.load %arg2[%c0_1, %c0_2] : memref<100x256xbf16, #tpu.memory_space<vmem>>, vector<100x256xbf16>
    %cst = arith.constant dense<0.000000e+00> : vector<8x256xf32>
    %3 = tpu.matmul %1, %2, %cst {dimension_numbers = #tpu.dot_dimension_numbers<[1], [0], [0], [1], [0, 0, 1, 1], [], []>} : vector<8x100xbf16>, vector<100x256xbf16>, vector<8x256xf32> -> vector<8x256xf32>
    %c0_3 = arith.constant 0 : index
    %c0_4 = arith.constant 0 : index
    %4 = vector.load %arg3[%c0_3, %c0_4] : memref<1x256xf32, #tpu.memory_space<vmem>>, vector<1x256xf32>
    %5 = vector.broadcast %4 : vector<1x256xf32> to vector<8x256xf32>
    %6 = arith.addf %3, %5 : vector<8x256xf32>
    %cst_5 = arith.constant 0.000000e+00 : f32
    %7 = vector.broadcast %cst_5 : f32 to vector<8x256xf32>
    %8 = arith.maximumf %6, %7 : vector<8x256xf32>
    %9 = arith.truncf %8 : vector<8x256xf32> to vector<8x256xbf16>
    %c0_6 = arith.constant 0 : index
    %c0_7 = arith.constant 0 : index
    %10 = vector.load %arg4[%c0_6, %c0_7] : memref<256x512xbf16, #tpu.memory_space<vmem>>, vector<256x512xbf16>
    %cst_8 = arith.constant dense<0.000000e+00> : vector<8x512xf32>
    %11 = tpu.matmul %9, %10, %cst_8 {dimension_numbers = #tpu.dot_dimension_numbers<[1], [0], [0], [1], [0, 0, 1, 1], [], []>} : vector<8x256xbf16>, vector<256x512xbf16>, vector<8x512xf32> -> vector<8x512xf32>
    %c0_9 = arith.constant 0 : index
    %c0_10 = arith.constant 0 : index
    %12 = vector.load %arg5[%c0_9, %c0_10] : memref<1x512xf32, #tpu.memory_space<vmem>>, vector<1x512xf32>
    %13 = vector.broadcast %12 : vector<1x512xf32> to vector<8x512xf32>
    %14 = arith.addf %11, %13 : vector<8x512xf32>
    %cst_11 = arith.constant 0.000000e+00 : f32
    %15 = vector.broadcast %cst_11 : f32 to vector<8x512xf32>
    %16 = arith.maximumf %14, %15 : vector<8x512xf32>
    %17 = arith.truncf %16 : vector<8x512xf32> to vector<8x512xbf16>
    %c0_12 = arith.constant 0 : index
    %c0_13 = arith.constant 0 : index
    %18 = vector.load %arg6[%c0_12, %c0_13] : memref<512x784xbf16, #tpu.memory_space<vmem>>, vector<512x784xbf16>
    %cst_14 = arith.constant dense<0.000000e+00> : vector<8x784xf32>
    %19 = tpu.matmul %17, %18, %cst_14 {dimension_numbers = #tpu.dot_dimension_numbers<[1], [0], [0], [1], [0, 0, 1, 1], [], []>} : vector<8x512xbf16>, vector<512x784xbf16>, vector<8x784xf32> -> vector<8x784xf32>
    %c0_15 = arith.constant 0 : index
    %c0_16 = arith.constant 0 : index
    %20 = vector.load %arg7[%c0_15, %c0_16] : memref<1x784xf32, #tpu.memory_space<vmem>>, vector<1x784xf32>
    %21 = vector.broadcast %20 : vector<1x784xf32> to vector<8x784xf32>
    %22 = arith.addf %19, %21 : vector<8x784xf32>
    %23 = math.tanh %22 : vector<8x784xf32>
    %c0_17 = arith.constant 0 : index
    %c0_18 = arith.constant 0 : index
    %24 = vector.load %arg8[%c0_17, %c0_18] : memref<8x784xf32, #tpu.memory_space<vmem>>, vector<8x784xf32>
    tpu.vector_store %arg8[%c0_17, %c0_18], %23 {strides = array<i32>} : memref<8x784xf32, #tpu.memory_space<vmem>>, vector<8x784xf32>,
    return
  }
  func.func @transform_0(%arg0: i32) -> (i32, i32) {
    %c0_i32 = arith.constant 0 : i32
    %c0_i32_0 = arith.constant 0 : i32
    return %arg0, %c0_i32 : i32, i32
  }
  func.func @transform_1(%arg0: i32) -> (i32, i32) {
    %c0_i32 = arith.constant 0 : i32
    %c0_i32_0 = arith.constant 0 : i32
    %c0_i32_1 = arith.constant 0 : i32
    return %c0_i32, %c0_i32_0 : i32, i32
  }
  func.func @transform_2(%arg0: i32) -> (i32, i32) {
    %c0_i32 = arith.constant 0 : i32
    %c0_i32_0 = arith.constant 0 : i32
    %c0_i32_1 = arith.constant 0 : i32
    return %c0_i32, %c0_i32_0 : i32, i32
  }
  func.func @transform_3(%arg0: i32) -> (i32, i32) {
    %c0_i32 = arith.constant 0 : i32
    %c0_i32_0 = arith.constant 0 : i32
    %c0_i32_1 = arith.constant 0 : i32
    return %c0_i32, %c0_i32_0 : i32, i32
  }
  func.func @transform_4(%arg0: i32) -> (i32, i32) {
    %c0_i32 = arith.constant 0 : i32
    %c0_i32_0 = arith.constant 0 : i32
    %c0_i32_1 = arith.constant 0 : i32
    return %c0_i32, %c0_i32_0 : i32, i32
  }
  func.func @transform_5(%arg0: i32) -> (i32, i32) {
    %c0_i32 = arith.constant 0 : i32
    %c0_i32_0 = arith.constant 0 : i32
    %c0_i32_1 = arith.constant 0 : i32
    return %c0_i32, %c0_i32_0 : i32, i32
  }
  func.func @transform_6(%arg0: i32) -> (i32, i32) {
    %c0_i32 = arith.constant 0 : i32
    %c0_i32_0 = arith.constant 0 : i32
    %c0_i32_1 = arith.constant 0 : i32
    return %c0_i32, %c0_i32_0 : i32, i32
  }
  func.func @transform_7(%arg0: i32) -> (i32, i32) {
    %c0_i32 = arith.constant 0 : i32
    %c0_i32_0 = arith.constant 0 : i32
    return %arg0, %c0_i32 : i32, i32
  }
}

</mosaic_0001>

<llo_original>
// kernel: generator_forward.1
$region0: #{generator_forward.1}
  #allocation0 [shape = 'u32[]', space=smem, size = 0x4, offset = 0x4, fixed_abs, tag = 'smem constant byte address 0x4 - core index']
  #allocation1 [shape = 'u32[144,128]{1,0:T(1,128)}', space=vmem, size = 0x12000, scoped, tag = 'internal scratch']
  %s0 = inlined_call_operand.vmem [shape: f32[8,100], index: 0, kind: input, shape index: {}]
  %s1 = inlined_call_operand.vmem [shape: bf16[100,256], index: 1, kind: input, shape index: {}]
  %s2 = inlined_call_operand.vmem [shape: f32[1,256], index: 2, kind: input, shape index: {}]
  %s3 = inlined_call_operand.vmem [shape: bf16[256,512], index: 3, kind: input, shape index: {}]
  %s4 = inlined_call_operand.vmem [shape: f32[1,512], index: 4, kind: input, shape index: {}]
  %s5 = inlined_call_operand.vmem [shape: bf16[512,784], index: 5, kind: input, shape index: {}]
  %s6 = inlined_call_operand.vmem [shape: f32[1,784], index: 6, kind: input, shape index: {}]
  %s7 = inlined_call_operand.vmem [shape: f32[8,784], index: 7, kind: output, shape index: {}]
  %s8 = sld [smem:[#allocation0]]
  $region38: #{generator_forward.1} parent=0
    _
  %s10 = ssub.s32 1, %s8
  %s11 = scalar_select 0, %s10, %s8
  // Predicated region
  $region2: #{generator_forward.1} parent=0 // pred_check
    _
  $region3: #{generator_forward.1} parent=0 // pred_check_branch
    %13 = sbr.rel (0) target = $region5
  $region4: #{generator_forward.1} parent=0 // pred_region
    _
  $region5: #{generator_forward.1} parent=0 // pred_fallthru
    _
  // Predicated region
  $region6: #{generator_forward.1} parent=0 // pred_check
    _
  $region7: #{generator_forward.1} parent=0 // pred_check_branch
    %15 = sbr.rel (0) target = $region9
  $region8: #{generator_forward.1} parent=0 // pred_region
    _
  $region9: #{generator_forward.1} parent=0 // pred_fallthru
    _
  // Predicated region
  $region10: #{generator_forward.1} parent=0 // pred_check
    _
  $region11: #{generator_forward.1} parent=0 // pred_check_branch
    %17 = sbr.rel (0) target = $region13
  $region12: #{generator_forward.1} parent=0 // pred_region
    _
  $region13: #{generator_forward.1} parent=0 // pred_fallthru
    _
  // Predicated region
  $region14: #{generator_forward.1} parent=0 // pred_check
    _
  $region15: #{generator_forward.1} parent=0 // pred_check_branch
    %19 = sbr.rel (0) target = $region17
  $region16: #{generator_forward.1} parent=0 // pred_region
    _
  $region17: #{generator_forward.1} parent=0 // pred_fallthru
    _
  // Predicated region
  $region18: #{generator_forward.1} parent=0 // pred_check
    _
  $region19: #{generator_forward.1} parent=0 // pred_check_branch
    %21 = sbr.rel (0) target = $region21
  $region20: #{generator_forward.1} parent=0 // pred_region
    _
  $region21: #{generator_forward.1} parent=0 // pred_fallthru
    _
  // Predicated region
  $region22: #{generator_forward.1} parent=0 // pred_check
    _
  $region23: #{generator_forward.1} parent=0 // pred_check_branch
    %23 = sbr.rel (0) target = $region25
  $region24: #{generator_forward.1} parent=0 // pred_region
    _
  $region25: #{generator_forward.1} parent=0 // pred_fallthru
    _
  // Predicated region
  $region26: #{generator_forward.1} parent=0 // pred_check
    _
  $region27: #{generator_forward.1} parent=0 // pred_check_branch
    %25 = sbr.rel (0) target = $region29
  $region28: #{generator_forward.1} parent=0 // pred_region
    _
  $region29: #{generator_forward.1} parent=0 // pred_fallthru
    _
  %v27 = vld [vmem:[%s0] sm:$0xff]
  %v28 = vpack.c.bf16 %v27, %v27
  %v29 = vld [vmem:[%s1] sm:$0xff]
  %v30 = vld [vmem:[%s1 + $0x8] sm:$0xff]
  %v31 = vld [vmem:[%s1 + $0x10] sm:$0xff]
  %v32 = vld [vmem:[%s1 + $0x18] sm:$0xff]
  %v33 = vld [vmem:[%s1 + $0x20] sm:$0xff]
  %v34 = vld [vmem:[%s1 + $0x28] sm:$0xff]
  %v35 = vld [vmem:[%s1 + $0x30] sm:$0xff]
  %v36 = vld [vmem:[%s1 + $0x38] sm:$0xff]
  %v37 = vld [vmem:[%s1 + $0x40] sm:$0xff]
  %v38 = vld [vmem:[%s1 + $0x48] sm:$0xff]
  %v39 = vld [vmem:[%s1 + $0x50] sm:$0xff]
  %v40 = vld [vmem:[%s1 + $0x58] sm:$0xff]
  %v41 = vld [vmem:[%s1 + $0x60] sm:$0x33]
  %v42 = vld [vmem:[%s2] sm:$0x3]
  %v44 = vlaneseq
  %v45 = vshrl.u32 %v44, 7
  %v46 = vsub.s32 0, %v45
  %v47 = vrot.slane %v42, %v46
  %v48 = vlaneseq
  %v49 = vshrl.u32 %v48, 7
  %v50 = vsub.s32 1, %v49
  %v51 = vrot.slane %v42, %v50
  %v67 = vunpack.c.l.b16 %v29
  %v68 = vunpack.c.h.b16 %v29
  %v69 = vunpack.c.l.b16 %v30
  %v70 = vunpack.c.h.b16 %v30
  %v71 = vunpack.c.l.b16 %v31
  %v72 = vunpack.c.h.b16 %v31
  %v73 = vunpack.c.l.b16 %v32
  %v74 = vunpack.c.h.b16 %v32
  %v75 = vunpack.c.l.b16 %v33
  %v76 = vunpack.c.h.b16 %v33
  %v77 = vunpack.c.l.b16 %v34
  %v78 = vunpack.c.h.b16 %v34
  %v79 = vunpack.c.l.b16 %v35
  %v80 = vunpack.c.h.b16 %v35
  %v81 = vunpack.c.l.b16 %v36
  %v82 = vunpack.c.h.b16 %v36
  %v83 = vunpack.c.l.b16 %v37
  %v84 = vunpack.c.h.b16 %v37
  %v85 = vunpack.c.l.b16 %v38
  %v86 = vunpack.c.h.b16 %v38
  %v87 = vunpack.c.l.b16 %v39
  %v88 = vunpack.c.h.b16 %v39
  %v89 = vunpack.c.l.b16 %v40
  %v90 = vunpack.c.h.b16 %v40
  %v91 = vunpack.c.l.b16 %v41
  %v92 = vunpack.c.h.b16 %v41
  %v93 = vpack.c.b16 %v69, %v67
  %v94 = vpack.c.b16 %v70, %v68
  %v95 = vpack.c.b16 %v73, %v71
  %v96 = vpack.c.b16 %v74, %v72
  %v97 = vpack.c.b16 %v77, %v75
  %v98 = vpack.c.b16 %v78, %v76
  %v99 = vpack.c.b16 %v81, %v79
  %v100 = vpack.c.b16 %v82, %v80
  %v101 = vpack.c.b16 %v85, %v83
  %v102 = vpack.c.b16 %v86, %v84
  %v103 = vpack.c.b16 %v89, %v87
  %v104 = vpack.c.b16 %v90, %v88
  %v105 = vpack.c.b16 %v91, %v91
  %v106 = vpack.c.b16 %v92, %v92
  %vm119 = vcmask 818176
  %v121 = vsel %vm119, %v28, 0
  %vm123 = vcmask 1041408
  %v125 = vsel %vm123, %v105, 0
  %v128 = vsel %vm123, %v106, 0
  %130 = vmatprep.subr.bf16.mxu0 %v94
  %131 = vmatpush1.bf16.msra.mxu0 %v93
  %132 = vmatprep.subr.bf16.mxu0 %v96
  %133 = vmatpush1.bf16.msra.mxu0 %v95
  %134 = vmatprep.subr.bf16.mxu0 %v98
  %135 = vmatpush1.bf16.msra.mxu0 %v97
  %136 = vmatprep.subr.bf16.mxu0 %v100
  %137 = vmatpush1.bf16.msra.mxu0 %v99
  %138 = vmatprep.subr.bf16.mxu0 %v102
  %139 = vmatpush1.bf16.msra.mxu0 %v101
  %140 = vmatprep.subr.bf16.mxu0 %v104
  %141 = vmatpush1.bf16.msra.mxu0 %v103
  %142 = vmatprep.subr.bf16.mxu0 %v128
  %143 = vmatpush1.bf16.msra.mxu0 %v125
  %144 = vmatprep.subr.bf16.mxu0 0
  %145 = vmatpush1.bf16.msra.mxu0 0
  %146 = vmatprep.subr.bf16.mxu0 0
  %147 = vmatpush1.bf16.msra.mxu0 0
  %148 = vmatprep.subr.bf16.mxu0 0
  %149 = vmatpush1.bf16.msra.mxu0 0
  %150 = vmatprep.subr.bf16.mxu0 0
  %151 = vmatpush1.bf16.msra.mxu0 0
  %152 = vmatprep.subr.bf16.mxu0 0
  %153 = vmatpush1.bf16.msra.mxu0 0
  %154 = vmatprep.subr.bf16.mxu0 0
  %155 = vmatpush1.bf16.msra.mxu0 0
  %156 = vmatprep.subr.bf16.mxu0 0
  %157 = vmatpush1.bf16.msra.mxu0 0
  %158 = vmatprep.subr.bf16.mxu0 0
  %159 = vmatpush1.bf16.msra.mxu0 0
  %160 = vmatprep.subr.bf16.mxu0 0
  %161 = vmatpush1.bf16.msra.mxu0 0
  %162 = vmatprep.mubr.bf16.mxu0 0
  %163 = vmatmul.mubr.bf16.gmra.mrb[0].mxu0 %v121
  %v164 = vpop.f32.mrb[0].mxu0
  %v165 = vadd.f32 %v47, %v164
  %v166 = vpop.f32.mrb[0].mxu0
  %v167 = vadd.f32 %v51, %v166
  %v168 = vpop.f32.mrb[0].mxu0
  %v169 = vpop.f32.mrb[0].mxu0
  %170 = vdwg.mxu0
  %v171 = vmax.f32 %v165, 0.0
  %v172 = vmax.f32 %v167, 0.0
  %v173 = vpack.c.bf16 %v171, %v171
  %v174 = vpack.c.bf16 %v172, %v172
  %v175 = vld [vmem:[%s3] sm:$0xff]
  %v176 = vld [vmem:[%s3 + $0x8] sm:$0xff]
  %v177 = vld [vmem:[%s3 + $0x10] sm:$0xff]
  %v178 = vld [vmem:[%s3 + $0x18] sm:$0xff]
  %v179 = vld [vmem:[%s3 + $0x20] sm:$0xff]
  %v180 = vld [vmem:[%s3 + $0x28] sm:$0xff]
  %v181 = vld [vmem:[%s3 + $0x30] sm:$0xff]
  %v182 = vld [vmem:[%s3 + $0x38] sm:$0xff]
  %v183 = vld [vmem:[%s3 + $0x40] sm:$0xff]
  %v184 = vld [vmem:[%s3 + $0x48] sm:$0xff]
  %v185 = vld [vmem:[%s3 + $0x50] sm:$0xff]
  %v186 = vld [vmem:[%s3 + $0x58] sm:$0xff]
  %v187 = vld [vmem:[%s3 + $0x60] sm:$0xff]
  %v188 = vld [vmem:[%s3 + $0x68] sm:$0xff]
  %v189 = vld [vmem:[%s3 + $0x70] sm:$0xff]
  %v190 = vld [vmem:[%s3 + $0x78] sm:$0xff]
  %v191 = vld [vmem:[%s3 + $0x80] sm:$0xff]
  %v192 = vld [vmem:[%s3 + $0x88] sm:$0xff]
  %v193 = vld [vmem:[%s3 + $0x90] sm:$0xff]
  %v194 = vld [vmem:[%s3 + $0x98] sm:$0xff]
  %v195 = vld [vmem:[%s3 + $0xa0] sm:$0xff]
  %v196 = vld [vmem:[%s3 + $0xa8] sm:$0xff]
  %v197 = vld [vmem:[%s3 + $0xb0] sm:$0xff]
  %v198 = vld [vmem:[%s3 + $0xb8] sm:$0xff]
  %v199 = vld [vmem:[%s3 + $0xc0] sm:$0xff]
  %v200 = vld [vmem:[%s3 + $0xc8] sm:$0xff]
  %v201 = vld [vmem:[%s3 + $0xd0] sm:$0xff]
  %v202 = vld [vmem:[%s3 + $0xd8] sm:$0xff]
  %v203 = vld [vmem:[%s3 + $0xe0] sm:$0xff]
  %v204 = vld [vmem:[%s3 + $0xe8] sm:$0xff]
  %v205 = vld [vmem:[%s3 + $0xf0] sm:$0xff]
  %v206 = vld [vmem:[%s3 + $0xf8] sm:$0xff]
  %v207 = vld [vmem:[%s3 + $0x100] sm:$0xff]
  %v208 = vld [vmem:[%s3 + $0x108] sm:$0xff]
  %v209 = vld [vmem:[%s3 + $0x110] sm:$0xff]
  %v210 = vld [vmem:[%s3 + $0x118] sm:$0xff]
  %v211 = vld [vmem:[%s3 + $0x120] sm:$0xff]
  %v212 = vld [vmem:[%s3 + $0x128] sm:$0xff]
  %v213 = vld [vmem:[%s3 + $0x130] sm:$0xff]
  %v214 = vld [vmem:[%s3 + $0x138] sm:$0xff]
  %v215 = vld [vmem:[%s3 + $0x140] sm:$0xff]
  %v216 = vld [vmem:[%s3 + $0x148] sm:$0xff]
  %v217 = vld [vmem:[%s3 + $0x150] sm:$0xff]
  %v218 = vld [vmem:[%s3 + $0x158] sm:$0xff]
  %v219 = vld [vmem:[%s3 + $0x160] sm:$0xff]
  %v220 = vld [vmem:[%s3 + $0x168] sm:$0xff]
  %v221 = vld [vmem:[%s3 + $0x170] sm:$0xff]
  %v222 = vld [vmem:[%s3 + $0x178] sm:$0xff]
  %v223 = vld [vmem:[%s3 + $0x180] sm:$0xff]
  %v224 = vld [vmem:[%s3 + $0x188] sm:$0xff]
  %v225 = vld [vmem:[%s3 + $0x190] sm:$0xff]
  %v226 = vld [vmem:[%s3 + $0x198] sm:$0xff]
  %v227 = vld [vmem:[%s3 + $0x1a0] sm:$0xff]
  %v228 = vld [vmem:[%s3 + $0x1a8] sm:$0xff]
  %v229 = vld [vmem:[%s3 + $0x1b0] sm:$0xff]
  %v230 = vld [vmem:[%s3 + $0x1b8] sm:$0xff]
  %v231 = vld [vmem:[%s3 + $0x1c0] sm:$0xff]
  %v232 = vld [vmem:[%s3 + $0x1c8] sm:$0xff]
  %v233 = vld [vmem:[%s3 + $0x1d0] sm:$0xff]
  %v234 = vld [vmem:[%s3 + $0x1d8] sm:$0xff]
  %v235 = vld [vmem:[%s3 + $0x1e0] sm:$0xff]
  %v236 = vld [vmem:[%s3 + $0x1e8] sm:$0xff]
  %v237 = vld [vmem:[%s3 + $0x1f0] sm:$0xff]
  %v238 = vld [vmem:[%s3 + $0x1f8] sm:$0xff]
  %v239 = vld [vmem:[%s4] sm:$0xf]
  %v241 = vlaneseq
  %v242 = vshrl.u32 %v241, 7
  %v243 = vsub.s32 0, %v242
  %v244 = vrot.slane %v239, %v243
  %v245 = vlaneseq
  %v246 = vshrl.u32 %v245, 7
  %v247 = vsub.s32 1, %v246
  %v248 = vrot.slane %v239, %v247
  %v249 = vlaneseq
  %v250 = vshrl.u32 %v249, 7
  %v251 = vsub.s32 2, %v250
  %v252 = vrot.slane %v239, %v251
  %v253 = vlaneseq
  %v254 = vshrl.u32 %v253, 7
  %v255 = vsub.s32 3, %v254
  %v256 = vrot.slane %v239, %v255
  %v325 = vunpack.c.l.b16 %v175
  %v326 = vunpack.c.h.b16 %v175
  %v327 = vunpack.c.l.b16 %v176
  %v328 = vunpack.c.h.b16 %v176
  %v329 = vunpack.c.l.b16 %v177
  %v330 = vunpack.c.h.b16 %v177
  %v331 = vunpack.c.l.b16 %v178
  %v332 = vunpack.c.h.b16 %v178
  %v333 = vunpack.c.l.b16 %v179
  %v334 = vunpack.c.h.b16 %v179
  %v335 = vunpack.c.l.b16 %v180
  %v336 = vunpack.c.h.b16 %v180
  %v337 = vunpack.c.l.b16 %v181
  %v338 = vunpack.c.h.b16 %v181
  %v339 = vunpack.c.l.b16 %v182
  %v340 = vunpack.c.h.b16 %v182
  %v341 = vunpack.c.l.b16 %v183
  %v342 = vunpack.c.h.b16 %v183
  %v343 = vunpack.c.l.b16 %v184
  %v344 = vunpack.c.h.b16 %v184
  %v345 = vunpack.c.l.b16 %v185
  %v346 = vunpack.c.h.b16 %v185
  %v347 = vunpack.c.l.b16 %v186
  %v348 = vunpack.c.h.b16 %v186
  %v349 = vunpack.c.l.b16 %v187
  %v350 = vunpack.c.h.b16 %v187
  %v351 = vunpack.c.l.b16 %v188
  %v352 = vunpack.c.h.b16 %v188
  %v353 = vunpack.c.l.b16 %v189
  %v354 = vunpack.c.h.b16 %v189
  %v355 = vunpack.c.l.b16 %v190
  %v356 = vunpack.c.h.b16 %v190
  %v357 = vunpack.c.l.b16 %v191
  %v358 = vunpack.c.h.b16 %v191
  %v359 = vunpack.c.l.b16 %v192
  %v360 = vunpack.c.h.b16 %v192
  %v361 = vunpack.c.l.b16 %v193
  %v362 = vunpack.c.h.b16 %v193
  %v363 = vunpack.c.l.b16 %v194
  %v364 = vunpack.c.h.b16 %v194
  %v365 = vunpack.c.l.b16 %v195
  %v366 = vunpack.c.h.b16 %v195
  %v367 = vunpack.c.l.b16 %v196
  %v368 = vunpack.c.h.b16 %v196
  %v369 = vunpack.c.l.b16 %v197
  %v370 = vunpack.c.h.b16 %v197
  %v371 = vunpack.c.l.b16 %v198
  %v372 = vunpack.c.h.b16 %v198
  %v373 = vunpack.c.l.b16 %v199
  %v374 = vunpack.c.h.b16 %v199
  %v375 = vunpack.c.l.b16 %v200
  %v376 = vunpack.c.h.b16 %v200
  %v377 = vunpack.c.l.b16 %v201
  %v378 = vunpack.c.h.b16 %v201
  %v379 = vunpack.c.l.b16 %v202
  %v380 = vunpack.c.h.b16 %v202
  %v381 = vunpack.c.l.b16 %v203
  %v382 = vunpack.c.h.b16 %v203
  %v383 = vunpack.c.l.b16 %v204
  %v384 = vunpack.c.h.b16 %v204
  %v385 = vunpack.c.l.b16 %v205
  %v386 = vunpack.c.h.b16 %v205
  %v387 = vunpack.c.l.b16 %v206
  %v388 = vunpack.c.h.b16 %v206
  %v389 = vunpack.c.l.b16 %v207
  %v390 = vunpack.c.h.b16 %v207
  %v391 = vunpack.c.l.b16 %v208
  %v392 = vunpack.c.h.b16 %v208
  %v393 = vunpack.c.l.b16 %v209
  %v394 = vunpack.c.h.b16 %v209
  %v395 = vunpack.c.l.b16 %v210
  %v396 = vunpack.c.h.b16 %v210
  %v397 = vunpack.c.l.b16 %v211
  %v398 = vunpack.c.h.b16 %v211
  %v399 = vunpack.c.l.b16 %v212
  %v400 = vunpack.c.h.b16 %v212
  %v401 = vunpack.c.l.b16 %v213
  %v402 = vunpack.c.h.b16 %v213
  %v403 = vunpack.c.l.b16 %v214
  %v404 = vunpack.c.h.b16 %v214
  %v405 = vunpack.c.l.b16 %v215
  %v406 = vunpack.c.h.b16 %v215
  %v407 = vunpack.c.l.b16 %v216
  %v408 = vunpack.c.h.b16 %v216
  %v409 = vunpack.c.l.b16 %v217
  %v410 = vunpack.c.h.b16 %v217
  %v411 = vunpack.c.l.b16 %v218
  %v412 = vunpack.c.h.b16 %v218
  %v413 = vunpack.c.l.b16 %v219
  %v414 = vunpack.c.h.b16 %v219
  %v415 = vunpack.c.l.b16 %v220
  %v416 = vunpack.c.h.b16 %v220
  %v417 = vunpack.c.l.b16 %v221
  %v418 = vunpack.c.h.b16 %v221
  %v419 = vunpack.c.l.b16 %v222
  %v420 = vunpack.c.h.b16 %v222
  %v421 = vunpack.c.l.b16 %v223
  %v422 = vunpack.c.h.b16 %v223
  %v423 = vunpack.c.l.b16 %v224
  %v424 = vunpack.c.h.b16 %v224
  %v425 = vunpack.c.l.b16 %v225
  %v426 = vunpack.c.h.b16 %v225
  %v427 = vunpack.c.l.b16 %v226
  %v428 = vunpack.c.h.b16 %v226
  %v429 = vunpack.c.l.b16 %v227
  %v430 = vunpack.c.h.b16 %v227
  %v431 = vunpack.c.l.b16 %v228
  %v432 = vunpack.c.h.b16 %v228
  %v433 = vunpack.c.l.b16 %v229
  %v434 = vunpack.c.h.b16 %v229
  %v435 = vunpack.c.l.b16 %v230
  %v436 = vunpack.c.h.b16 %v230
  %v437 = vunpack.c.l.b16 %v231
  %v438 = vunpack.c.h.b16 %v231
  %v439 = vunpack.c.l.b16 %v232
  %v440 = vunpack.c.h.b16 %v232
  %v441 = vunpack.c.l.b16 %v233
  %v442 = vunpack.c.h.b16 %v233
  %v443 = vunpack.c.l.b16 %v234
  %v444 = vunpack.c.h.b16 %v234
  %v445 = vunpack.c.l.b16 %v235
  %v446 = vunpack.c.h.b16 %v235
  %v447 = vunpack.c.l.b16 %v236
  %v448 = vunpack.c.h.b16 %v236
  %v449 = vunpack.c.l.b16 %v237
  %v450 = vunpack.c.h.b16 %v237
  %v451 = vunpack.c.l.b16 %v238
  %v452 = vunpack.c.h.b16 %v238
  %v453 = vpack.c.b16 %v329, %v325
  %v454 = vpack.c.b16 %v330, %v326
  %v455 = vpack.c.b16 %v331, %v327
  %v456 = vpack.c.b16 %v332, %v328
  %v457 = vpack.c.b16 %v337, %v333
  %v458 = vpack.c.b16 %v338, %v334
  %v459 = vpack.c.b16 %v339, %v335
  %v460 = vpack.c.b16 %v340, %v336
  %v461 = vpack.c.b16 %v345, %v341
  %v462 = vpack.c.b16 %v346, %v342
  %v463 = vpack.c.b16 %v347, %v343
  %v464 = vpack.c.b16 %v348, %v344
  %v465 = vpack.c.b16 %v353, %v349
  %v466 = vpack.c.b16 %v354, %v350
  %v467 = vpack.c.b16 %v355, %v351
  %v468 = vpack.c.b16 %v356, %v352
  %v469 = vpack.c.b16 %v361, %v357
  %v470 = vpack.c.b16 %v362, %v358
  %v471 = vpack.c.b16 %v363, %v359
  %v472 = vpack.c.b16 %v364, %v360
  %v473 = vpack.c.b16 %v369, %v365
  %v474 = vpack.c.b16 %v370, %v366
  %v475 = vpack.c.b16 %v371, %v367
  %v476 = vpack.c.b16 %v372, %v368
  %v477 = vpack.c.b16 %v377, %v373
  %v478 = vpack.c.b16 %v378, %v374
  %v479 = vpack.c.b16 %v379, %v375
  %v480 = vpack.c.b16 %v380, %v376
  %v481 = vpack.c.b16 %v385, %v381
  %v482 = vpack.c.b16 %v386, %v382
  %v483 = vpack.c.b16 %v387, %v383
  %v484 = vpack.c.b16 %v388, %v384
  %v485 = vpack.c.b16 %v393, %v389
  %v486 = vpack.c.b16 %v394, %v390
  %v487 = vpack.c.b16 %v395, %v391
  %v488 = vpack.c.b16 %v396, %v392
  %v489 = vpack.c.b16 %v401, %v397
  %v490 = vpack.c.b16 %v402, %v398
  %v491 = vpack.c.b16 %v403, %v399
  %v492 = vpack.c.b16 %v404, %v400
  %v493 = vpack.c.b16 %v409, %v405
  %v494 = vpack.c.b16 %v410, %v406
  %v495 = vpack.c.b16 %v411, %v407
  %v496 = vpack.c.b16 %v412, %v408
  %v497 = vpack.c.b16 %v417, %v413
  %v498 = vpack.c.b16 %v418, %v414
  %v499 = vpack.c.b16 %v419, %v415
  %v500 = vpack.c.b16 %v420, %v416
  %v501 = vpack.c.b16 %v425, %v421
  %v502 = vpack.c.b16 %v426, %v422
  %v503 = vpack.c.b16 %v427, %v423
  %v504 = vpack.c.b16 %v428, %v424
  %v505 = vpack.c.b16 %v433, %v429
  %v506 = vpack.c.b16 %v434, %v430
  %v507 = vpack.c.b16 %v435, %v431
  %v508 = vpack.c.b16 %v436, %v432
  %v509 = vpack.c.b16 %v441, %v437
  %v510 = vpack.c.b16 %v442, %v438
  %v511 = vpack.c.b16 %v443, %v439
  %v512 = vpack.c.b16 %v444, %v440
  %v513 = vpack.c.b16 %v449, %v445
  %v514 = vpack.c.b16 %v450, %v446
  %v515 = vpack.c.b16 %v451, %v447
  %v516 = vpack.c.b16 %v452, %v448
  %581 = vmatprep.subr.bf16.mxu0 %v454
  %582 = vmatpush1.bf16.msra.mxu0 %v453
  %583 = vmatprep.subr.bf16.mxu0 %v458
  %584 = vmatpush1.bf16.msra.mxu0 %v457
  %585 = vmatprep.subr.bf16.mxu0 %v462
  %586 = vmatpush1.bf16.msra.mxu0 %v461
  %587 = vmatprep.subr.bf16.mxu0 %v466
  %588 = vmatpush1.bf16.msra.mxu0 %v465
  %589 = vmatprep.subr.bf16.mxu0 %v470
  %590 = vmatpush1.bf16.msra.mxu0 %v469
  %591 = vmatprep.subr.bf16.mxu0 %v474
  %592 = vmatpush1.bf16.msra.mxu0 %v473
  %593 = vmatprep.subr.bf16.mxu0 %v478
  %594 = vmatpush1.bf16.msra.mxu0 %v477
  %595 = vmatprep.subr.bf16.mxu0 %v482
  %596 = vmatpush1.bf16.msra.mxu0 %v481
  %597 = vmatprep.subr.bf16.mxu0 %v486
  %598 = vmatpush1.bf16.msra.mxu0 %v485
  %599 = vmatprep.subr.bf16.mxu0 %v490
  %600 = vmatpush1.bf16.msra.mxu0 %v489
  %601 = vmatprep.subr.bf16.mxu0 %v494
  %602 = vmatpush1.bf16.msra.mxu0 %v493
  %603 = vmatprep.subr.bf16.mxu0 %v498
  %604 = vmatpush1.bf16.msra.mxu0 %v497
  %605 = vmatprep.subr.bf16.mxu0 %v502
  %606 = vmatpush1.bf16.msra.mxu0 %v501
  %607 = vmatprep.subr.bf16.mxu0 %v506
  %608 = vmatpush1.bf16.msra.mxu0 %v505
  %609 = vmatprep.subr.bf16.mxu0 %v510
  %610 = vmatpush1.bf16.msra.mxu0 %v509
  %611 = vmatprep.subr.bf16.mxu0 %v514
  %612 = vmatpush1.bf16.msra.mxu0 %v513
  %613 = vmatprep.mubr.bf16.mxu0 %v174
  %614 = vmatmul.mubr.bf16.gmra.mrb[0].mxu0 %v173
  %v615 = vpop.f32.mrb[0].mxu0
  %v616 = vadd.f32 %v244, %v615
  %v617 = vpop.f32.mrb[0].mxu0
  %v618 = vadd.f32 %v248, %v617
  %v619 = vpop.f32.mrb[0].mxu0
  %v620 = vpop.f32.mrb[0].mxu0
  %621 = vdwg.mxu0
  %622 = vmatprep.subr.bf16.mxu0 %v456
  %623 = vmatpush1.bf16.msra.mxu0 %v455
  %624 = vmatprep.subr.bf16.mxu0 %v460
  %625 = vmatpush1.bf16.msra.mxu0 %v459
  %626 = vmatprep.subr.bf16.mxu0 %v464
  %627 = vmatpush1.bf16.msra.mxu0 %v463
  %628 = vmatprep.subr.bf16.mxu0 %v468
  %629 = vmatpush1.bf16.msra.mxu0 %v467
  %630 = vmatprep.subr.bf16.mxu0 %v472
  %631 = vmatpush1.bf16.msra.mxu0 %v471
  %632 = vmatprep.subr.bf16.mxu0 %v476
  %633 = vmatpush1.bf16.msra.mxu0 %v475
  %634 = vmatprep.subr.bf16.mxu0 %v480
  %635 = vmatpush1.bf16.msra.mxu0 %v479
  %636 = vmatprep.subr.bf16.mxu0 %v484
  %637 = vmatpush1.bf16.msra.mxu0 %v483
  %638 = vmatprep.subr.bf16.mxu0 %v488
  %639 = vmatpush1.bf16.msra.mxu0 %v487
  %640 = vmatprep.subr.bf16.mxu0 %v492
  %641 = vmatpush1.bf16.msra.mxu0 %v491
  %642 = vmatprep.subr.bf16.mxu0 %v496
  %643 = vmatpush1.bf16.msra.mxu0 %v495
  %644 = vmatprep.subr.bf16.mxu0 %v500
  %645 = vmatpush1.bf16.msra.mxu0 %v499
  %646 = vmatprep.subr.bf16.mxu0 %v504
  %647 = vmatpush1.bf16.msra.mxu0 %v503
  %648 = vmatprep.subr.bf16.mxu0 %v508
  %649 = vmatpush1.bf16.msra.mxu0 %v507
  %650 = vmatprep.subr.bf16.mxu0 %v512
  %651 = vmatpush1.bf16.msra.mxu0 %v511
  %652 = vmatprep.subr.bf16.mxu0 %v516
  %653 = vmatpush1.bf16.msra.mxu0 %v515
  %654 = vmatprep.mubr.bf16.mxu0 %v174
  %655 = vmatmul.mubr.bf16.gmra.mrb[0].mxu0 %v173
  %v656 = vpop.f32.mrb[0].mxu0
  %v657 = vadd.f32 %v252, %v656
  %v658 = vpop.f32.mrb[0].mxu0
  %v659 = vadd.f32 %v256, %v658
  %v660 = vpop.f32.mrb[0].mxu0
  %v661 = vpop.f32.mrb[0].mxu0
  %662 = vdwg.mxu0
  %v663 = vmax.f32 %v616, 0.0
  %v664 = vmax.f32 %v618, 0.0
  %v665 = vmax.f32 %v657, 0.0
  %v666 = vmax.f32 %v659, 0.0
  %v667 = vpack.c.bf16 %v663, %v663
  %v668 = vpack.c.bf16 %v664, %v664
  %v669 = vpack.c.bf16 %v665, %v665
  %v670 = vpack.c.bf16 %v666, %v666
  %v671 = vld [vmem:[%s5] sm:$0xff]
  %v672 = vld [vmem:[%s5 + $0x8] sm:$0xff]
  %v673 = vld [vmem:[%s5 + $0x10] sm:$0xff]
  %v674 = vld [vmem:[%s5 + $0x18] sm:$0xf]
  %v675 = vld [vmem:[%s5 + $0x1c] sm:$0xff]
  %v676 = vld [vmem:[%s5 + $0x24] sm:$0xff]
  %v677 = vld [vmem:[%s5 + $0x2c] sm:$0xff]
  %v678 = vld [vmem:[%s5 + $0x34] sm:$0xf]
  %v679 = vld [vmem:[%s5 + $0x38] sm:$0xff]
  %v680 = vld [vmem:[%s5 + $0x40] sm:$0xff]
  %v681 = vld [vmem:[%s5 + $0x48] sm:$0xff]
  %v682 = vld [vmem:[%s5 + $0x50] sm:$0xf]
  %v683 = vld [vmem:[%s5 + $0x54] sm:$0xff]
  %v684 = vld [vmem:[%s5 + $0x5c] sm:$0xff]
  %v685 = vld [vmem:[%s5 + $0x64] sm:$0xff]
  %v686 = vld [vmem:[%s5 + $0x6c] sm:$0xf]
  %v687 = vld [vmem:[%s5 + $0x70] sm:$0xff]
  %v688 = vld [vmem:[%s5 + $0x78] sm:$0xff]
  %v689 = vld [vmem:[%s5 + $0x80] sm:$0xff]
  %v690 = vld [vmem:[%s5 + $0x88] sm:$0xf]
  %v691 = vld [vmem:[%s5 + $0x8c] sm:$0xff]
  %v692 = vld [vmem:[%s5 + $0x94] sm:$0xff]
  %v693 = vld [vmem:[%s5 + $0x9c] sm:$0xff]
  %v694 = vld [vmem:[%s5 + $0xa4] sm:$0xf]
  %v695 = vld [vmem:[%s5 + $0xa8] sm:$0xff]
  %v696 = vld [vmem:[%s5 + $0xb0] sm:$0xff]
  %v697 = vld [vmem:[%s5 + $0xb8] sm:$0xff]
  %v698 = vld [vmem:[%s5 + $0xc0] sm:$0xf]
  %v699 = vld [vmem:[%s5 + $0xc4] sm:$0xff]
  %v700 = vld [vmem:[%s5 + $0xcc] sm:$0xff]
  %v701 = vld [vmem:[%s5 + $0xd4] sm:$0xff]
  %v702 = vld [vmem:[%s5 + $0xdc] sm:$0xf]
  %v703 = vld [vmem:[%s5 + $0xe0] sm:$0xff]
  %v704 = vld [vmem:[%s5 + $0xe8] sm:$0xff]
  %v705 = vld [vmem:[%s5 + $0xf0] sm:$0xff]
  %v706 = vld [vmem:[%s5 + $0xf8] sm:$0xf]
  %v707 = vld [vmem:[%s5 + $0xfc] sm:$0xff]
  %v708 = vld [vmem:[%s5 + $0x104] sm:$0xff]
  %v709 = vld [vmem:[%s5 + $0x10c] sm:$0xff]
  %v710 = vld [vmem:[%s5 + $0x114] sm:$0xf]
  %v711 = vld [vmem:[%s5 + $0x118] sm:$0xff]
  %v712 = vld [vmem:[%s5 + $0x120] sm:$0xff]
  %v713 = vld [vmem:[%s5 + $0x128] sm:$0xff]
  %v714 = vld [vmem:[%s5 + $0x130] sm:$0xf]
  %v715 = vld [vmem:[%s5 + $0x134] sm:$0xff]
  %v716 = vld [vmem:[%s5 + $0x13c] sm:$0xff]
  %v717 = vld [vmem:[%s5 + $0x144] sm:$0xff]
  %v718 = vld [vmem:[%s5 + $0x14c] sm:$0xf]
  %v719 = vld [vmem:[%s5 + $0x150] sm:$0xff]
  %v720 = vld [vmem:[%s5 + $0x158] sm:$0xff]
  %v721 = vld [vmem:[%s5 + $0x160] sm:$0xff]
  %v722 = vld [vmem:[%s5 + $0x168] sm:$0xf]
  %v723 = vld [vmem:[%s5 + $0x16c] sm:$0xff]
  %v724 = vld [vmem:[%s5 + $0x174] sm:$0xff]
  %v725 = vld [vmem:[%s5 + $0x17c] sm:$0xff]
  %v726 = vld [vmem:[%s5 + $0x184] sm:$0xf]
  %v727 = vld [vmem:[%s5 + $0x188] sm:$0xff]
  %v728 = vld [vmem:[%s5 + $0x190] sm:$0xff]
  %v729 = vld [vmem:[%s5 + $0x198] sm:$0xff]
  %v730 = vld [vmem:[%s5 + $0x1a0] sm:$0xf]
  %v731 = vld [vmem:[%s5 + $0x1a4] sm:$0xff]
  %v732 = vld [vmem:[%s5 + $0x1ac] sm:$0xff]
  %v733 = vld [vmem:[%s5 + $0x1b4] sm:$0xff]
  %v734 = vld [vmem:[%s5 + $0x1bc] sm:$0xf]
  %v735 = vld [vmem:[%s5 + $0x1c0] sm:$0xff]
  %v736 = vld [vmem:[%s5 + $0x1c8] sm:$0xff]
  %v737 = vld [vmem:[%s5 + $0x1d0] sm:$0xff]
  %v738 = vld [vmem:[%s5 + $0x1d8] sm:$0xf]
  %v739 = vld [vmem:[%s5 + $0x1dc] sm:$0xff]
  %v740 = vld [vmem:[%s5 + $0x1e4] sm:$0xff]
  %v741 = vld [vmem:[%s5 + $0x1ec] sm:$0xff]
  %v742 = vld [vmem:[%s5 + $0x1f4] sm:$0xf]
  %v743 = vld [vmem:[%s5 + $0x1f8] sm:$0xff]
  %v744 = vld [vmem:[%s5 + $0x200] sm:$0xff]
  %v745 = vld [vmem:[%s5 + $0x208] sm:$0xff]
  %v746 = vld [vmem:[%s5 + $0x210] sm:$0xf]
  %v747 = vld [vmem:[%s5 + $0x214] sm:$0xff]
  %v748 = vld [vmem:[%s5 + $0x21c] sm:$0xff]
  %v749 = vld [vmem:[%s5 + $0x224] sm:$0xff]
  %v750 = vld [vmem:[%s5 + $0x22c] sm:$0xf]
  %v751 = vld [vmem:[%s5 + $0x230] sm:$0xff]
  %v752 = vld [vmem:[%s5 + $0x238] sm:$0xff]
  %v753 = vld [vmem:[%s5 + $0x240] sm:$0xff]
  %v754 = vld [vmem:[%s5 + $0x248] sm:$0xf]
  %v755 = vld [vmem:[%s5 + $0x24c] sm:$0xff]
  %v756 = vld [vmem:[%s5 + $0x254] sm:$0xff]
  %v757 = vld [vmem:[%s5 + $0x25c] sm:$0xff]
  %v758 = vld [vmem:[%s5 + $0x264] sm:$0xf]
  %v759 = vld [vmem:[%s5 + $0x268] sm:$0xff]
  %v760 = vld [vmem:[%s5 + $0x270] sm:$0xff]
  %v761 = vld [vmem:[%s5 + $0x278] sm:$0xff]
  %v762 = vld [vmem:[%s5 + $0x280] sm:$0xf]
  %v763 = vld [vmem:[%s5 + $0x284] sm:$0xff]
  %v764 = vld [vmem:[%s5 + $0x28c] sm:$0xff]
  %v765 = vld [vmem:[%s5 + $0x294] sm:$0xff]
  %v766 = vld [vmem:[%s5 + $0x29c] sm:$0xf]
  %v767 = vld [vmem:[%s5 + $0x2a0] sm:$0xff]
  %v768 = vld [vmem:[%s5 + $0x2a8] sm:$0xff]
  %v769 = vld [vmem:[%s5 + $0x2b0] sm:$0xff]
  %v770 = vld [vmem:[%s5 + $0x2b8] sm:$0xf]
  %v771 = vld [vmem:[%s5 + $0x2bc] sm:$0xff]
  %v772 = vld [vmem:[%s5 + $0x2c4] sm:$0xff]
  %v773 = vld [vmem:[%s5 + $0x2cc] sm:$0xff]
  %v774 = vld [vmem:[%s5 + $0x2d4] sm:$0xf]
  %v775 = vld [vmem:[%s5 + $0x2d8] sm:$0xff]
  %v776 = vld [vmem:[%s5 + $0x2e0] sm:$0xff]
  %v777 = vld [vmem:[%s5 + $0x2e8] sm:$0xff]
  %v778 = vld [vmem:[%s5 + $0x2f0] sm:$0xf]
  %v779 = vld [vmem:[%s5 + $0x2f4] sm:$0xff]
  %v780 = vld [vmem:[%s5 + $0x2fc] sm:$0xff]
  %v781 = vld [vmem:[%s5 + $0x304] sm:$0xff]
  %v782 = vld [vmem:[%s5 + $0x30c] sm:$0xf]
  %v783 = vld [vmem:[%s5 + $0x310] sm:$0xff]
  %v784 = vld [vmem:[%s5 + $0x318] sm:$0xff]
  %v785 = vld [vmem:[%s5 + $0x320] sm:$0xff]
  %v786 = vld [vmem:[%s5 + $0x328] sm:$0xf]
  %v787 = vld [vmem:[%s5 + $0x32c] sm:$0xff]
  %v788 = vld [vmem:[%s5 + $0x334] sm:$0xff]
  %v789 = vld [vmem:[%s5 + $0x33c] sm:$0xff]
  %v790 = vld [vmem:[%s5 + $0x344] sm:$0xf]
  %v791 = vld [vmem:[%s5 + $0x348] sm:$0xff]
  %v792 = vld [vmem:[%s5 + $0x350] sm:$0xff]
  %v793 = vld [vmem:[%s5 + $0x358] sm:$0xff]
  %v794 = vld [vmem:[%s5 + $0x360] sm:$0xf]
  %v795 = vld [vmem:[%s5 + $0x364] sm:$0xff]
  %v796 = vld [vmem:[%s5 + $0x36c] sm:$0xff]
  %v797 = vld [vmem:[%s5 + $0x374] sm:$0xff]
  %v798 = vld [vmem:[%s5 + $0x37c] sm:$0xf]
  %v799 = vld [vmem:[%s5 + $0x380] sm:$0xff]
  %v800 = vld [vmem:[%s5 + $0x388] sm:$0xff]
  %v801 = vld [vmem:[%s5 + $0x390] sm:$0xff]
  %v802 = vld [vmem:[%s5 + $0x398] sm:$0xf]
  %v803 = vld [vmem:[%s5 + $0x39c] sm:$0xff]
  %v804 = vld [vmem:[%s5 + $0x3a4] sm:$0xff]
  %v805 = vld [vmem:[%s5 + $0x3ac] sm:$0xff]
  %v806 = vld [vmem:[%s5 + $0x3b4] sm:$0xf]
  %v807 = vld [vmem:[%s5 + $0x3b8] sm:$0xff]
  %v808 = vld [vmem:[%s5 + $0x3c0] sm:$0xff]
  %v809 = vld [vmem:[%s5 + $0x3c8] sm:$0xff]
  %v810 = vld [vmem:[%s5 + $0x3d0] sm:$0xf]
  %v811 = vld [vmem:[%s5 + $0x3d4] sm:$0xff]
  %v812 = vld [vmem:[%s5 + $0x3dc] sm:$0xff]
  %v813 = vld [vmem:[%s5 + $0x3e4] sm:$0xff]
  %v814 = vld [vmem:[%s5 + $0x3ec] sm:$0xf]
  %v815 = vld [vmem:[%s5 + $0x3f0] sm:$0xff]
  %v816 = vld [vmem:[%s5 + $0x3f8] sm:$0xff]
  %v817 = vld [vmem:[%s5 + $0x400] sm:$0xff]
  %v818 = vld [vmem:[%s5 + $0x408] sm:$0xf]
  %v819 = vld [vmem:[%s5 + $0x40c] sm:$0xff]
  %v820 = vld [vmem:[%s5 + $0x414] sm:$0xff]
  %v821 = vld [vmem:[%s5 + $0x41c] sm:$0xff]
  %v822 = vld [vmem:[%s5 + $0x424] sm:$0xf]
  %v823 = vld [vmem:[%s5 + $0x428] sm:$0xff]
  %v824 = vld [vmem:[%s5 + $0x430] sm:$0xff]
  %v825 = vld [vmem:[%s5 + $0x438] sm:$0xff]
  %v826 = vld [vmem:[%s5 + $0x440] sm:$0xf]
  %v827 = vld [vmem:[%s5 + $0x444] sm:$0xff]
  %v828 = vld [vmem:[%s5 + $0x44c] sm:$0xff]
  %v829 = vld [vmem:[%s5 + $0x454] sm:$0xff]
  %v830 = vld [vmem:[%s5 + $0x45c] sm:$0xf]
  %v831 = vld [vmem:[%s5 + $0x460] sm:$0xff]
  %v832 = vld [vmem:[%s5 + $0x468] sm:$0xff]
  %v833 = vld [vmem:[%s5 + $0x470] sm:$0xff]
  %v834 = vld [vmem:[%s5 + $0x478] sm:$0xf]
  %v835 = vld [vmem:[%s5 + $0x47c] sm:$0xff]
  %v836 = vld [vmem:[%s5 + $0x484] sm:$0xff]
  %v837 = vld [vmem:[%s5 + $0x48c] sm:$0xff]
  %v838 = vld [vmem:[%s5 + $0x494] sm:$0xf]
  %v839 = vld [vmem:[%s5 + $0x498] sm:$0xff]
  %v840 = vld [vmem:[%s5 + $0x4a0] sm:$0xff]
  %v841 = vld [vmem:[%s5 + $0x4a8] sm:$0xff]
  %v842 = vld [vmem:[%s5 + $0x4b0] sm:$0xf]
  %v843 = vld [vmem:[%s5 + $0x4b4] sm:$0xff]
  %v844 = vld [vmem:[%s5 + $0x4bc] sm:$0xff]
  %v845 = vld [vmem:[%s5 + $0x4c4] sm:$0xff]
  %v846 = vld [vmem:[%s5 + $0x4cc] sm:$0xf]
  %v847 = vld [vmem:[%s5 + $0x4d0] sm:$0xff]
  %v848 = vld [vmem:[%s5 + $0x4d8] sm:$0xff]
  %v849 = vld [vmem:[%s5 + $0x4e0] sm:$0xff]
  %v850 = vld [vmem:[%s5 + $0x4e8] sm:$0xf]
  %v851 = vld [vmem:[%s5 + $0x4ec] sm:$0xff]
  %v852 = vld [vmem:[%s5 + $0x4f4] sm:$0xff]
  %v853 = vld [vmem:[%s5 + $0x4fc] sm:$0xff]
  %v854 = vld [vmem:[%s5 + $0x504] sm:$0xf]
  %v855 = vld [vmem:[%s5 + $0x508] sm:$0xff]
  %v856 = vld [vmem:[%s5 + $0x510] sm:$0xff]
  %v857 = vld [vmem:[%s5 + $0x518] sm:$0xff]
  %v858 = vld [vmem:[%s5 + $0x520] sm:$0xf]
  %v859 = vld [vmem:[%s5 + $0x524] sm:$0xff]
  %v860 = vld [vmem:[%s5 + $0x52c] sm:$0xff]
  %v861 = vld [vmem:[%s5 + $0x534] sm:$0xff]
  %v862 = vld [vmem:[%s5 + $0x53c] sm:$0xf]
  %v863 = vld [vmem:[%s5 + $0x540] sm:$0xff]
  %v864 = vld [vmem:[%s5 + $0x548] sm:$0xff]
  %v865 = vld [vmem:[%s5 + $0x550] sm:$0xff]
  %v866 = vld [vmem:[%s5 + $0x558] sm:$0xf]
  %v867 = vld [vmem:[%s5 + $0x55c] sm:$0xff]
  %v868 = vld [vmem:[%s5 + $0x564] sm:$0xff]
  %v869 = vld [vmem:[%s5 + $0x56c] sm:$0xff]
  %v870 = vld [vmem:[%s5 + $0x574] sm:$0xf]
  %v871 = vld [vmem:[%s5 + $0x578] sm:$0xff]
  %v872 = vld [vmem:[%s5 + $0x580] sm:$0xff]
  %v873 = vld [vmem:[%s5 + $0x588] sm:$0xff]
  %v874 = vld [vmem:[%s5 + $0x590] sm:$0xf]
  %v875 = vld [vmem:[%s5 + $0x594] sm:$0xff]
  %v876 = vld [vmem:[%s5 + $0x59c] sm:$0xff]
  %v877 = vld [vmem:[%s5 + $0x5a4] sm:$0xff]
  %v878 = vld [vmem:[%s5 + $0x5ac] sm:$0xf]
  %v879 = vld [vmem:[%s5 + $0x5b0] sm:$0xff]
  %v880 = vld [vmem:[%s5 + $0x5b8] sm:$0xff]
  %v881 = vld [vmem:[%s5 + $0x5c0] sm:$0xff]
  %v882 = vld [vmem:[%s5 + $0x5c8] sm:$0xf]
  %v883 = vld [vmem:[%s5 + $0x5cc] sm:$0xff]
  %v884 = vld [vmem:[%s5 + $0x5d4] sm:$0xff]
  %v885 = vld [vmem:[%s5 + $0x5dc] sm:$0xff]
  %v886 = vld [vmem:[%s5 + $0x5e4] sm:$0xf]
  %v887 = vld [vmem:[%s5 + $0x5e8] sm:$0xff]
  %v888 = vld [vmem:[%s5 + $0x5f0] sm:$0xff]
  %v889 = vld [vmem:[%s5 + $0x5f8] sm:$0xff]
  %v890 = vld [vmem:[%s5 + $0x600] sm:$0xf]
  %v891 = vld [vmem:[%s5 + $0x604] sm:$0xff]
  %v892 = vld [vmem:[%s5 + $0x60c] sm:$0xff]
  %v893 = vld [vmem:[%s5 + $0x614] sm:$0xff]
  %v894 = vld [vmem:[%s5 + $0x61c] sm:$0xf]
  %v895 = vld [vmem:[%s5 + $0x620] sm:$0xff]
  %v896 = vld [vmem:[%s5 + $0x628] sm:$0xff]
  %v897 = vld [vmem:[%s5 + $0x630] sm:$0xff]
  %v898 = vld [vmem:[%s5 + $0x638] sm:$0xf]
  %v899 = vld [vmem:[%s5 + $0x63c] sm:$0xff]
  %v900 = vld [vmem:[%s5 + $0x644] sm:$0xff]
  %v901 = vld [vmem:[%s5 + $0x64c] sm:$0xff]
  %v902 = vld [vmem:[%s5 + $0x654] sm:$0xf]
  %v903 = vld [vmem:[%s5 + $0x658] sm:$0xff]
  %v904 = vld [vmem:[%s5 + $0x660] sm:$0xff]
  %v905 = vld [vmem:[%s5 + $0x668] sm:$0xff]
  %v906 = vld [vmem:[%s5 + $0x670] sm:$0xf]
  %v907 = vld [vmem:[%s5 + $0x674] sm:$0xff]
  %v908 = vld [vmem:[%s5 + $0x67c] sm:$0xff]
  %v909 = vld [vmem:[%s5 + $0x684] sm:$0xff]
  %v910 = vld [vmem:[%s5 + $0x68c] sm:$0xf]
  %v911 = vld [vmem:[%s5 + $0x690] sm:$0xff]
  %v912 = vld [vmem:[%s5 + $0x698] sm:$0xff]
  %v913 = vld [vmem:[%s5 + $0x6a0] sm:$0xff]
  %v914 = vld [vmem:[%s5 + $0x6a8] sm:$0xf]
  %v915 = vld [vmem:[%s5 + $0x6ac] sm:$0xff]
  %v916 = vld [vmem:[%s5 + $0x6b4] sm:$0xff]
  %v917 = vld [vmem:[%s5 + $0x6bc] sm:$0xff]
  %v918 = vld [vmem:[%s5 + $0x6c4] sm:$0xf]
  %v919 = vld [vmem:[%s5 + $0x6c8] sm:$0xff]
  %v920 = vld [vmem:[%s5 + $0x6d0] sm:$0xff]
  %v921 = vld [vmem:[%s5 + $0x6d8] sm:$0xff]
  %v922 = vld [vmem:[%s5 + $0x6e0] sm:$0xf]
  %v923 = vld [vmem:[%s5 + $0x6e4] sm:$0xff]
  %v924 = vld [vmem:[%s5 + $0x6ec] sm:$0xff]
  %v925 = vld [vmem:[%s5 + $0x6f4] sm:$0xff]
  %v926 = vld [vmem:[%s5 + $0x6fc] sm:$0xf]
  %v927 = vld [vmem:[%s6] sm:$0x7f]
  %v929 = vlaneseq
  %v930 = vshrl.u32 %v929, 7
  %v931 = vsub.s32 0, %v930
  %v932 = vrot.slane %v927, %v931
  %v933 = vlaneseq
  %v934 = vshrl.u32 %v933, 7
  %v935 = vsub.s32 1, %v934
  %v936 = vrot.slane %v927, %v935
  %v937 = vlaneseq
  %v938 = vshrl.u32 %v937, 7
  %v939 = vsub.s32 2, %v938
  %v940 = vrot.slane %v927, %v939
  %v941 = vlaneseq
  %v942 = vshrl.u32 %v941, 7
  %v943 = vsub.s32 3, %v942
  %v944 = vrot.slane %v927, %v943
  %v945 = vlaneseq
  %v946 = vshrl.u32 %v945, 7
  %v947 = vsub.s32 4, %v946
  %v948 = vrot.slane %v927, %v947
  %v949 = vlaneseq
  %v950 = vshrl.u32 %v949, 7
  %v951 = vsub.s32 5, %v950
  %v952 = vrot.slane %v927, %v951
  %v953 = vlaneseq
  %v954 = vshrl.u32 %v953, 7
  %v955 = vsub.s32 6, %v954
  %v956 = vrot.slane %v927, %v955
  %v1220 = vunpack.c.l.b16 %v671
  %v1221 = vunpack.c.h.b16 %v671
  %v1222 = vunpack.c.l.b16 %v672
  %v1223 = vunpack.c.h.b16 %v672
  %v1224 = vunpack.c.l.b16 %v673
  %v1225 = vunpack.c.h.b16 %v673
  %v1226 = vunpack.c.l.b16 %v674
  %v1227 = vunpack.c.l.b16 %v675
  %v1228 = vunpack.c.h.b16 %v675
  %v1229 = vunpack.c.l.b16 %v676
  %v1230 = vunpack.c.h.b16 %v676
  %v1231 = vunpack.c.l.b16 %v677
  %v1232 = vunpack.c.h.b16 %v677
  %v1233 = vunpack.c.l.b16 %v678
  %v1234 = vunpack.c.l.b16 %v679
  %v1235 = vunpack.c.h.b16 %v679
  %v1236 = vunpack.c.l.b16 %v680
  %v1237 = vunpack.c.h.b16 %v680
  %v1238 = vunpack.c.l.b16 %v681
  %v1239 = vunpack.c.h.b16 %v681
  %v1240 = vunpack.c.l.b16 %v682
  %v1241 = vunpack.c.l.b16 %v683
  %v1242 = vunpack.c.h.b16 %v683
  %v1243 = vunpack.c.l.b16 %v684
  %v1244 = vunpack.c.h.b16 %v684
  %v1245 = vunpack.c.l.b16 %v685
  %v1246 = vunpack.c.h.b16 %v685
  %v1247 = vunpack.c.l.b16 %v686
  %v1248 = vunpack.c.l.b16 %v687
  %v1249 = vunpack.c.h.b16 %v687
  %v1250 = vunpack.c.l.b16 %v688
  %v1251 = vunpack.c.h.b16 %v688
  %v1252 = vunpack.c.l.b16 %v689
  %v1253 = vunpack.c.h.b16 %v689
  %v1254 = vunpack.c.l.b16 %v690
  %v1255 = vunpack.c.l.b16 %v691
  %v1256 = vunpack.c.h.b16 %v691
  %v1257 = vunpack.c.l.b16 %v692
  %v1258 = vunpack.c.h.b16 %v692
  %v1259 = vunpack.c.l.b16 %v693
  %v1260 = vunpack.c.h.b16 %v693
  %v1261 = vunpack.c.l.b16 %v694
  %v1262 = vunpack.c.l.b16 %v695
  %v1263 = vunpack.c.h.b16 %v695
  %v1264 = vunpack.c.l.b16 %v696
  %v1265 = vunpack.c.h.b16 %v696
  %v1266 = vunpack.c.l.b16 %v697
  %v1267 = vunpack.c.h.b16 %v697
  %v1268 = vunpack.c.l.b16 %v698
  %v1269 = vunpack.c.l.b16 %v699
  %v1270 = vunpack.c.h.b16 %v699
  %v1271 = vunpack.c.l.b16 %v700
  %v1272 = vunpack.c.h.b16 %v700
  %v1273 = vunpack.c.l.b16 %v701
  %v1274 = vunpack.c.h.b16 %v701
  %v1275 = vunpack.c.l.b16 %v702
  %v1276 = vunpack.c.l.b16 %v703
  %v1277 = vunpack.c.h.b16 %v703
  %v1278 = vunpack.c.l.b16 %v704
  %v1279 = vunpack.c.h.b16 %v704
  %v1280 = vunpack.c.l.b16 %v705
  %v1281 = vunpack.c.h.b16 %v705
  %v1282 = vunpack.c.l.b16 %v706
  %v1283 = vunpack.c.l.b16 %v707
  %v1284 = vunpack.c.h.b16 %v707
  %v1285 = vunpack.c.l.b16 %v708
  %v1286 = vunpack.c.h.b16 %v708
  %v1287 = vunpack.c.l.b16 %v709
  %v1288 = vunpack.c.h.b16 %v709
  %v1289 = vunpack.c.l.b16 %v710
  %v1290 = vunpack.c.l.b16 %v711
  %v1291 = vunpack.c.h.b16 %v711
  %v1292 = vunpack.c.l.b16 %v712
  %v1293 = vunpack.c.h.b16 %v712
  %v1294 = vunpack.c.l.b16 %v713
  %v1295 = vunpack.c.h.b16 %v713
  %v1296 = vunpack.c.l.b16 %v714
  %v1297 = vunpack.c.l.b16 %v715
  %v1298 = vunpack.c.h.b16 %v715
  %v1299 = vunpack.c.l.b16 %v716
  %v1300 = vunpack.c.h.b16 %v716
  %v1301 = vunpack.c.l.b16 %v717
  %v1302 = vunpack.c.h.b16 %v717
  %v1303 = vunpack.c.l.b16 %v718
  %v1304 = vunpack.c.l.b16 %v719
  %v1305 = vunpack.c.h.b16 %v719
  %v1306 = vunpack.c.l.b16 %v720
  %v1307 = vunpack.c.h.b16 %v720
  %v1308 = vunpack.c.l.b16 %v721
  %v1309 = vunpack.c.h.b16 %v721
  %v1310 = vunpack.c.l.b16 %v722
  %v1311 = vunpack.c.l.b16 %v723
  %v1312 = vunpack.c.h.b16 %v723
  %v1313 = vunpack.c.l.b16 %v724
  %v1314 = vunpack.c.h.b16 %v724
  %v1315 = vunpack.c.l.b16 %v725
  %v1316 = vunpack.c.h.b16 %v725
  %v1317 = vunpack.c.l.b16 %v726
  %v1318 = vunpack.c.l.b16 %v727
  %v1319 = vunpack.c.h.b16 %v727
  %v1320 = vunpack.c.l.b16 %v728
  %v1321 = vunpack.c.h.b16 %v728
  %v1322 = vunpack.c.l.b16 %v729
  %v1323 = vunpack.c.h.b16 %v729
  %v1324 = vunpack.c.l.b16 %v730
  %v1325 = vunpack.c.l.b16 %v731
  %v1326 = vunpack.c.h.b16 %v731
  %v1327 = vunpack.c.l.b16 %v732
  %v1328 = vunpack.c.h.b16 %v732
  %v1329 = vunpack.c.l.b16 %v733
  %v1330 = vunpack.c.h.b16 %v733
  %v1331 = vunpack.c.l.b16 %v734
  %v1332 = vunpack.c.l.b16 %v735
  %v1333 = vunpack.c.h.b16 %v735
  %v1334 = vunpack.c.l.b16 %v736
  %v1335 = vunpack.c.h.b16 %v736
  %v1336 = vunpack.c.l.b16 %v737
  %v1337 = vunpack.c.h.b16 %v737
  %v1338 = vunpack.c.l.b16 %v738
  %v1339 = vunpack.c.l.b16 %v739
  %v1340 = vunpack.c.h.b16 %v739
  %v1341 = vunpack.c.l.b16 %v740
  %v1342 = vunpack.c.h.b16 %v740
  %v1343 = vunpack.c.l.b16 %v741
  %v1344 = vunpack.c.h.b16 %v741
  %v1345 = vunpack.c.l.b16 %v742
  %v1346 = vunpack.c.l.b16 %v743
  %v1347 = vunpack.c.h.b16 %v743
  %v1348 = vunpack.c.l.b16 %v744
  %v1349 = vunpack.c.h.b16 %v744
  %v1350 = vunpack.c.l.b16 %v745
  %v1351 = vunpack.c.h.b16 %v745
  %v1352 = vunpack.c.l.b16 %v746
  %v1353 = vunpack.c.l.b16 %v747
  %v1354 = vunpack.c.h.b16 %v747
  %v1355 = vunpack.c.l.b16 %v748
  %v1356 = vunpack.c.h.b16 %v748
  %v1357 = vunpack.c.l.b16 %v749
  %v1358 = vunpack.c.h.b16 %v749
  %v1359 = vunpack.c.l.b16 %v750
  %v1360 = vunpack.c.l.b16 %v751
  %v1361 = vunpack.c.h.b16 %v751
  %v1362 = vunpack.c.l.b16 %v752
  %v1363 = vunpack.c.h.b16 %v752
  %v1364 = vunpack.c.l.b16 %v753
  %v1365 = vunpack.c.h.b16 %v753
  %v1366 = vunpack.c.l.b16 %v754
  %v1367 = vunpack.c.l.b16 %v755
  %v1368 = vunpack.c.h.b16 %v755
  %v1369 = vunpack.c.l.b16 %v756
  %v1370 = vunpack.c.h.b16 %v756
  %v1371 = vunpack.c.l.b16 %v757
  %v1372 = vunpack.c.h.b16 %v757
  %v1373 = vunpack.c.l.b16 %v758
  %v1374 = vunpack.c.l.b16 %v759
  %v1375 = vunpack.c.h.b16 %v759
  %v1376 = vunpack.c.l.b16 %v760
  %v1377 = vunpack.c.h.b16 %v760
  %v1378 = vunpack.c.l.b16 %v761
  %v1379 = vunpack.c.h.b16 %v761
  %v1380 = vunpack.c.l.b16 %v762
  %v1381 = vunpack.c.l.b16 %v763
  %v1382 = vunpack.c.h.b16 %v763
  %v1383 = vunpack.c.l.b16 %v764
  %v1384 = vunpack.c.h.b16 %v764
  %v1385 = vunpack.c.l.b16 %v765
  %v1386 = vunpack.c.h.b16 %v765
  %v1387 = vunpack.c.l.b16 %v766
  %v1388 = vunpack.c.l.b16 %v767
  %v1389 = vunpack.c.h.b16 %v767
  %v1390 = vunpack.c.l.b16 %v768
  %v1391 = vunpack.c.h.b16 %v768
  %v1392 = vunpack.c.l.b16 %v769
  %v1393 = vunpack.c.h.b16 %v769
  %v1394 = vunpack.c.l.b16 %v770
  %v1395 = vunpack.c.l.b16 %v771
  %v1396 = vunpack.c.h.b16 %v771
  %v1397 = vunpack.c.l.b16 %v772
  %v1398 = vunpack.c.h.b16 %v772
  %v1399 = vunpack.c.l.b16 %v773
  %v1400 = vunpack.c.h.b16 %v773
  %v1401 = vunpack.c.l.b16 %v774
  %v1402 = vunpack.c.l.b16 %v775
  %v1403 = vunpack.c.h.b16 %v775
  %v1404 = vunpack.c.l.b16 %v776
  %v1405 = vunpack.c.h.b16 %v776
  %v1406 = vunpack.c.l.b16 %v777
  %v1407 = vunpack.c.h.b16 %v777
  %v1408 = vunpack.c.l.b16 %v778
  %v1409 = vunpack.c.l.b16 %v779
  %v1410 = vunpack.c.h.b16 %v779
  %v1411 = vunpack.c.l.b16 %v780
  %v1412 = vunpack.c.h.b16 %v780
  %v1413 = vunpack.c.l.b16 %v781
  %v1414 = vunpack.c.h.b16 %v781
  %v1415 = vunpack.c.l.b16 %v782
  %v1416 = vunpack.c.l.b16 %v783
  %v1417 = vunpack.c.h.b16 %v783
  %v1418 = vunpack.c.l.b16 %v784
  %v1419 = vunpack.c.h.b16 %v784
  %v1420 = vunpack.c.l.b16 %v785
  %v1421 = vunpack.c.h.b16 %v785
  %v1422 = vunpack.c.l.b16 %v786
  %v1423 = vunpack.c.l.b16 %v787
  %v1424 = vunpack.c.h.b16 %v787
  %v1425 = vunpack.c.l.b16 %v788
  %v1426 = vunpack.c.h.b16 %v788
  %v1427 = vunpack.c.l.b16 %v789
  %v1428 = vunpack.c.h.b16 %v789
  %v1429 = vunpack.c.l.b16 %v790
  %v1430 = vunpack.c.l.b16 %v791
  %v1431 = vunpack.c.h.b16 %v791
  %v1432 = vunpack.c.l.b16 %v792
  %v1433 = vunpack.c.h.b16 %v792
  %v1434 = vunpack.c.l.b16 %v793
  %v1435 = vunpack.c.h.b16 %v793
  %v1436 = vunpack.c.l.b16 %v794
  %v1437 = vunpack.c.l.b16 %v795
  %v1438 = vunpack.c.h.b16 %v795
  %v1439 = vunpack.c.l.b16 %v796
  %v1440 = vunpack.c.h.b16 %v796
  %v1441 = vunpack.c.l.b16 %v797
  %v1442 = vunpack.c.h.b16 %v797
  %v1443 = vunpack.c.l.b16 %v798
  %v1444 = vunpack.c.l.b16 %v799
  %v1445 = vunpack.c.h.b16 %v799
  %v1446 = vunpack.c.l.b16 %v800
  %v1447 = vunpack.c.h.b16 %v800
  %v1448 = vunpack.c.l.b16 %v801
  %v1449 = vunpack.c.h.b16 %v801
  %v1450 = vunpack.c.l.b16 %v802
  %v1451 = vunpack.c.l.b16 %v803
  %v1452 = vunpack.c.h.b16 %v803
  %v1453 = vunpack.c.l.b16 %v804
  %v1454 = vunpack.c.h.b16 %v804
  %v1455 = vunpack.c.l.b16 %v805
  %v1456 = vunpack.c.h.b16 %v805
  %v1457 = vunpack.c.l.b16 %v806
  %v1458 = vunpack.c.l.b16 %v807
  %v1459 = vunpack.c.h.b16 %v807
  %v1460 = vunpack.c.l.b16 %v808
  %v1461 = vunpack.c.h.b16 %v808
  %v1462 = vunpack.c.l.b16 %v809
  %v1463 = vunpack.c.h.b16 %v809
  %v1464 = vunpack.c.l.b16 %v810
  %v1465 = vunpack.c.l.b16 %v811
  %v1466 = vunpack.c.h.b16 %v811
  %v1467 = vunpack.c.l.b16 %v812
  %v1468 = vunpack.c.h.b16 %v812
  %v1469 = vunpack.c.l.b16 %v813
  %v1470 = vunpack.c.h.b16 %v813
  %v1471 = vunpack.c.l.b16 %v814
  %v1472 = vunpack.c.l.b16 %v815
  %v1473 = vunpack.c.h.b16 %v815
  %v1474 = vunpack.c.l.b16 %v816
  %v1475 = vunpack.c.h.b16 %v816
  %v1476 = vunpack.c.l.b16 %v817
  %v1477 = vunpack.c.h.b16 %v817
  %v1478 = vunpack.c.l.b16 %v818
  %v1479 = vunpack.c.l.b16 %v819
  %v1480 = vunpack.c.h.b16 %v819
  %v1481 = vunpack.c.l.b16 %v820
  %v1482 = vunpack.c.h.b16 %v820
  %v1483 = vunpack.c.l.b16 %v821
  %v1484 = vunpack.c.h.b16 %v821
  %v1485 = vunpack.c.l.b16 %v822
  %v1486 = vunpack.c.l.b16 %v823
  %v1487 = vunpack.c.h.b16 %v823
  %v1488 = vunpack.c.l.b16 %v824
  %v1489 = vunpack.c.h.b16 %v824
  %v1490 = vunpack.c.l.b16 %v825
  %v1491 = vunpack.c.h.b16 %v825
  %v1492 = vunpack.c.l.b16 %v826
  %v1493 = vunpack.c.l.b16 %v827
  %v1494 = vunpack.c.h.b16 %v827
  %v1495 = vunpack.c.l.b16 %v828
  %v1496 = vunpack.c.h.b16 %v828
  %v1497 = vunpack.c.l.b16 %v829
  %v1498 = vunpack.c.h.b16 %v829
  %v1499 = vunpack.c.l.b16 %v830
  %v1500 = vunpack.c.l.b16 %v831
  %v1501 = vunpack.c.h.b16 %v831
  %v1502 = vunpack.c.l.b16 %v832
  %v1503 = vunpack.c.h.b16 %v832
  %v1504 = vunpack.c.l.b16 %v833
  %v1505 = vunpack.c.h.b16 %v833
  %v1506 = vunpack.c.l.b16 %v834
  %v1507 = vunpack.c.l.b16 %v835
  %v1508 = vunpack.c.h.b16 %v835
  %v1509 = vunpack.c.l.b16 %v836
  %v1510 = vunpack.c.h.b16 %v836
  %v1511 = vunpack.c.l.b16 %v837
  %v1512 = vunpack.c.h.b16 %v837
  %v1513 = vunpack.c.l.b16 %v838
  %v1514 = vunpack.c.l.b16 %v839
  %v1515 = vunpack.c.h.b16 %v839
  %v1516 = vunpack.c.l.b16 %v840
  %v1517 = vunpack.c.h.b16 %v840
  %v1518 = vunpack.c.l.b16 %v841
  %v1519 = vunpack.c.h.b16 %v841
  %v1520 = vunpack.c.l.b16 %v842
  %v1521 = vunpack.c.l.b16 %v843
  %v1522 = vunpack.c.h.b16 %v843
  %v1523 = vunpack.c.l.b16 %v844
  %v1524 = vunpack.c.h.b16 %v844
  %v1525 = vunpack.c.l.b16 %v845
  %v1526 = vunpack.c.h.b16 %v845
  %v1527 = vunpack.c.l.b16 %v846
  %v1528 = vunpack.c.l.b16 %v847
  %v1529 = vunpack.c.h.b16 %v847
  %v1530 = vunpack.c.l.b16 %v848
  %v1531 = vunpack.c.h.b16 %v848
  %v1532 = vunpack.c.l.b16 %v849
  %v1533 = vunpack.c.h.b16 %v849
  %v1534 = vunpack.c.l.b16 %v850
  %v1535 = vunpack.c.l.b16 %v851
  %v1536 = vunpack.c.h.b16 %v851
  %v1537 = vunpack.c.l.b16 %v852
  %v1538 = vunpack.c.h.b16 %v852
  %v1539 = vunpack.c.l.b16 %v853
  %v1540 = vunpack.c.h.b16 %v853
  %v1541 = vunpack.c.l.b16 %v854
  %v1542 = vunpack.c.l.b16 %v855
  %v1543 = vunpack.c.h.b16 %v855
  %v1544 = vunpack.c.l.b16 %v856
  %v1545 = vunpack.c.h.b16 %v856
  %v1546 = vunpack.c.l.b16 %v857
  %v1547 = vunpack.c.h.b16 %v857
  %v1548 = vunpack.c.l.b16 %v858
  %v1549 = vunpack.c.l.b16 %v859
  %v1550 = vunpack.c.h.b16 %v859
  %v1551 = vunpack.c.l.b16 %v860
  %v1552 = vunpack.c.h.b16 %v860
  %v1553 = vunpack.c.l.b16 %v861
  %v1554 = vunpack.c.h.b16 %v861
  %v1555 = vunpack.c.l.b16 %v862
  %v1556 = vunpack.c.l.b16 %v863
  %v1557 = vunpack.c.h.b16 %v863
  %v1558 = vunpack.c.l.b16 %v864
  %v1559 = vunpack.c.h.b16 %v864
  %v1560 = vunpack.c.l.b16 %v865
  %v1561 = vunpack.c.h.b16 %v865
  %v1562 = vunpack.c.l.b16 %v866
  %v1563 = vunpack.c.l.b16 %v867
  %v1564 = vunpack.c.h.b16 %v867
  %v1565 = vunpack.c.l.b16 %v868
  %v1566 = vunpack.c.h.b16 %v868
  %v1567 = vunpack.c.l.b16 %v869
  %v1568 = vunpack.c.h.b16 %v869
  %v1569 = vunpack.c.l.b16 %v870
  %v1570 = vunpack.c.l.b16 %v871
  %v1571 = vunpack.c.h.b16 %v871
  %v1572 = vunpack.c.l.b16 %v872
  %v1573 = vunpack.c.h.b16 %v872
  %v1574 = vunpack.c.l.b16 %v873
  %v1575 = vunpack.c.h.b16 %v873
  %v1576 = vunpack.c.l.b16 %v874
  %v1577 = vunpack.c.l.b16 %v875
  %v1578 = vunpack.c.h.b16 %v875
  %v1579 = vunpack.c.l.b16 %v876
  %v1580 = vunpack.c.h.b16 %v876
  %v1581 = vunpack.c.l.b16 %v877
  %v1582 = vunpack.c.h.b16 %v877
  %v1583 = vunpack.c.l.b16 %v878
  %v1584 = vunpack.c.l.b16 %v879
  %v1585 = vunpack.c.h.b16 %v879
  %v1586 = vunpack.c.l.b16 %v880
  %v1587 = vunpack.c.h.b16 %v880
  %v1588 = vunpack.c.l.b16 %v881
  %v1589 = vunpack.c.h.b16 %v881
  %v1590 = vunpack.c.l.b16 %v882
  %v1591 = vunpack.c.l.b16 %v883
  %v1592 = vunpack.c.h.b16 %v883
  %v1593 = vunpack.c.l.b16 %v884
  %v1594 = vunpack.c.h.b16 %v884
  %v1595 = vunpack.c.l.b16 %v885
  %v1596 = vunpack.c.h.b16 %v885
  %v1597 = vunpack.c.l.b16 %v886
  %v1598 = vunpack.c.l.b16 %v887
  %v1599 = vunpack.c.h.b16 %v887
  %v1600 = vunpack.c.l.b16 %v888
  %v1601 = vunpack.c.h.b16 %v888
  %v1602 = vunpack.c.l.b16 %v889
  %v1603 = vunpack.c.h.b16 %v889
  %v1604 = vunpack.c.l.b16 %v890
  %v1605 = vunpack.c.l.b16 %v891
  %v1606 = vunpack.c.h.b16 %v891
  %v1607 = vunpack.c.l.b16 %v892
  %v1608 = vunpack.c.h.b16 %v892
  %v1609 = vunpack.c.l.b16 %v893
  %v1610 = vunpack.c.h.b16 %v893
  %v1611 = vunpack.c.l.b16 %v894
  %v1612 = vunpack.c.l.b16 %v895
  %v1613 = vunpack.c.h.b16 %v895
  %v1614 = vunpack.c.l.b16 %v896
  %v1615 = vunpack.c.h.b16 %v896
  %v1616 = vunpack.c.l.b16 %v897
  %v1617 = vunpack.c.h.b16 %v897
  %v1618 = vunpack.c.l.b16 %v898
  %v1619 = vunpack.c.l.b16 %v899
  %v1620 = vunpack.c.h.b16 %v899
  %v1621 = vunpack.c.l.b16 %v900
  %v1622 = vunpack.c.h.b16 %v900
  %v1623 = vunpack.c.l.b16 %v901
  %v1624 = vunpack.c.h.b16 %v901
  %v1625 = vunpack.c.l.b16 %v902
  %v1626 = vunpack.c.l.b16 %v903
  %v1627 = vunpack.c.h.b16 %v903
  %v1628 = vunpack.c.l.b16 %v904
  %v1629 = vunpack.c.h.b16 %v904
  %v1630 = vunpack.c.l.b16 %v905
  %v1631 = vunpack.c.h.b16 %v905
  %v1632 = vunpack.c.l.b16 %v906
  %v1633 = vunpack.c.l.b16 %v907
  %v1634 = vunpack.c.h.b16 %v907
  %v1635 = vunpack.c.l.b16 %v908
  %v1636 = vunpack.c.h.b16 %v908
  %v1637 = vunpack.c.l.b16 %v909
  %v1638 = vunpack.c.h.b16 %v909
  %v1639 = vunpack.c.l.b16 %v910
  %v1640 = vunpack.c.l.b16 %v911
  %v1641 = vunpack.c.h.b16 %v911
  %v1642 = vunpack.c.l.b16 %v912
  %v1643 = vunpack.c.h.b16 %v912
  %v1644 = vunpack.c.l.b16 %v913
  %v1645 = vunpack.c.h.b16 %v913
  %v1646 = vunpack.c.l.b16 %v914
  %v1647 = vunpack.c.l.b16 %v915
  %v1648 = vunpack.c.h.b16 %v915
  %v1649 = vunpack.c.l.b16 %v916
  %v1650 = vunpack.c.h.b16 %v916
  %v1651 = vunpack.c.l.b16 %v917
  %v1652 = vunpack.c.h.b16 %v917
  %v1653 = vunpack.c.l.b16 %v918
  %v1654 = vunpack.c.l.b16 %v919
  %v1655 = vunpack.c.h.b16 %v919
  %v1656 = vunpack.c.l.b16 %v920
  %v1657 = vunpack.c.h.b16 %v920
  %v1658 = vunpack.c.l.b16 %v921
  %v1659 = vunpack.c.h.b16 %v921
  %v1660 = vunpack.c.l.b16 %v922
  %v1661 = vunpack.c.l.b16 %v923
  %v1662 = vunpack.c.h.b16 %v923
  %v1663 = vunpack.c.l.b16 %v924
  %v1664 = vunpack.c.h.b16 %v924
  %v1665 = vunpack.c.l.b16 %v925
  %v1666 = vunpack.c.h.b16 %v925
  %v1667 = vunpack.c.l.b16 %v926
  %v1668 = vpack.c.b16 %v1227, %v1220
  %v1669 = vpack.c.b16 %v1228, %v1221
  %v1670 = vpack.c.b16 %v1229, %v1222
  %v1671 = vpack.c.b16 %v1230, %v1223
  %v1672 = vpack.c.b16 %v1231, %v1224
  %v1673 = vpack.c.b16 %v1232, %v1225
  %v1674 = vpack.c.b16 %v1233, %v1226
  %v1675 = vpack.c.b16 %v1241, %v1234
  %v1676 = vpack.c.b16 %v1242, %v1235
  %v1677 = vpack.c.b16 %v1243, %v1236
  %v1678 = vpack.c.b16 %v1244, %v1237
  %v1679 = vpack.c.b16 %v1245, %v1238
  %v1680 = vpack.c.b16 %v1246, %v1239
  %v1681 = vpack.c.b16 %v1247, %v1240
  %v1682 = vpack.c.b16 %v1255, %v1248
  %v1683 = vpack.c.b16 %v1256, %v1249
  %v1684 = vpack.c.b16 %v1257, %v1250
  %v1685 = vpack.c.b16 %v1258, %v1251
  %v1686 = vpack.c.b16 %v1259, %v1252
  %v1687 = vpack.c.b16 %v1260, %v1253
  %v1688 = vpack.c.b16 %v1261, %v1254
  %v1689 = vpack.c.b16 %v1269, %v1262
  %v1690 = vpack.c.b16 %v1270, %v1263
  %v1691 = vpack.c.b16 %v1271, %v1264
  %v1692 = vpack.c.b16 %v1272, %v1265
  %v1693 = vpack.c.b16 %v1273, %v1266
  %v1694 = vpack.c.b16 %v1274, %v1267
  %v1695 = vpack.c.b16 %v1275, %v1268
  %v1696 = vpack.c.b16 %v1283, %v1276
  %v1697 = vpack.c.b16 %v1284, %v1277
  %v1698 = vpack.c.b16 %v1285, %v1278
  %v1699 = vpack.c.b16 %v1286, %v1279
  %v1700 = vpack.c.b16 %v1287, %v1280
  %v1701 = vpack.c.b16 %v1288, %v1281
  %v1702 = vpack.c.b16 %v1289, %v1282
  %v1703 = vpack.c.b16 %v1297, %v1290
  %v1704 = vpack.c.b16 %v1298, %v1291
  %v1705 = vpack.c.b16 %v1299, %v1292
  %v1706 = vpack.c.b16 %v1300, %v1293
  %v1707 = vpack.c.b16 %v1301, %v1294
  %v1708 = vpack.c.b16 %v1302, %v1295
  %v1709 = vpack.c.b16 %v1303, %v1296
  %v1710 = vpack.c.b16 %v1311, %v1304
  %v1711 = vpack.c.b16 %v1312, %v1305
  %v1712 = vpack.c.b16 %v1313, %v1306
  %v1713 = vpack.c.b16 %v1314, %v1307
  %v1714 = vpack.c.b16 %v1315, %v1308
  %v1715 = vpack.c.b16 %v1316, %v1309
  %v1716 = vpack.c.b16 %v1317, %v1310
  %v1717 = vpack.c.b16 %v1325, %v1318
  %v1718 = vpack.c.b16 %v1326, %v1319
  %v1719 = vpack.c.b16 %v1327, %v1320
  %v1720 = vpack.c.b16 %v1328, %v1321
  %v1721 = vpack.c.b16 %v1329, %v1322
  %v1722 = vpack.c.b16 %v1330, %v1323
  %v1723 = vpack.c.b16 %v1331, %v1324
  %v1724 = vpack.c.b16 %v1339, %v1332
  %v1725 = vpack.c.b16 %v1340, %v1333
  %v1726 = vpack.c.b16 %v1341, %v1334
  %v1727 = vpack.c.b16 %v1342, %v1335
  %v1728 = vpack.c.b16 %v1343, %v1336
  %v1729 = vpack.c.b16 %v1344, %v1337
  %v1730 = vpack.c.b16 %v1345, %v1338
  %v1731 = vpack.c.b16 %v1353, %v1346
  %v1732 = vpack.c.b16 %v1354, %v1347
  %v1733 = vpack.c.b16 %v1355, %v1348
  %v1734 = vpack.c.b16 %v1356, %v1349
  %v1735 = vpack.c.b16 %v1357, %v1350
  %v1736 = vpack.c.b16 %v1358, %v1351
  %v1737 = vpack.c.b16 %v1359, %v1352
  %v1738 = vpack.c.b16 %v1367, %v1360
  %v1739 = vpack.c.b16 %v1368, %v1361
  %v1740 = vpack.c.b16 %v1369, %v1362
  %v1741 = vpack.c.b16 %v1370, %v1363
  %v1742 = vpack.c.b16 %v1371, %v1364
  %v1743 = vpack.c.b16 %v1372, %v1365
  %v1744 = vpack.c.b16 %v1373, %v1366
  %v1745 = vpack.c.b16 %v1381, %v1374
  %v1746 = vpack.c.b16 %v1382, %v1375
  %v1747 = vpack.c.b16 %v1383, %v1376
  %v1748 = vpack.c.b16 %v1384, %v1377
  %v1749 = vpack.c.b16 %v1385, %v1378
  %v1750 = vpack.c.b16 %v1386, %v1379
  %v1751 = vpack.c.b16 %v1387, %v1380
  %v1752 = vpack.c.b16 %v1395, %v1388
  %v1753 = vpack.c.b16 %v1396, %v1389
  %v1754 = vpack.c.b16 %v1397, %v1390
  %v1755 = vpack.c.b16 %v1398, %v1391
  %v1756 = vpack.c.b16 %v1399, %v1392
  %v1757 = vpack.c.b16 %v1400, %v1393
  %v1758 = vpack.c.b16 %v1401, %v1394
  %v1759 = vpack.c.b16 %v1409, %v1402
  %v1760 = vpack.c.b16 %v1410, %v1403
  %v1761 = vpack.c.b16 %v1411, %v1404
  %v1762 = vpack.c.b16 %v1412, %v1405
  %v1763 = vpack.c.b16 %v1413, %v1406
  %v1764 = vpack.c.b16 %v1414, %v1407
  %v1765 = vpack.c.b16 %v1415, %v1408
  %v1766 = vpack.c.b16 %v1423, %v1416
  %v1767 = vpack.c.b16 %v1424, %v1417
  %v1768 = vpack.c.b16 %v1425, %v1418
  %v1769 = vpack.c.b16 %v1426, %v1419
  %v1770 = vpack.c.b16 %v1427, %v1420
  %v1771 = vpack.c.b16 %v1428, %v1421
  %v1772 = vpack.c.b16 %v1429, %v1422
  %v1773 = vpack.c.b16 %v1437, %v1430
  %v1774 = vpack.c.b16 %v1438, %v1431
  %v1775 = vpack.c.b16 %v1439, %v1432
  %v1776 = vpack.c.b16 %v1440, %v1433
  %v1777 = vpack.c.b16 %v1441, %v1434
  %v1778 = vpack.c.b16 %v1442, %v1435
  %v1779 = vpack.c.b16 %v1443, %v1436
  %v1780 = vpack.c.b16 %v1451, %v1444
  %v1781 = vpack.c.b16 %v1452, %v1445
  %v1782 = vpack.c.b16 %v1453, %v1446
  %v1783 = vpack.c.b16 %v1454, %v1447
  %v1784 = vpack.c.b16 %v1455, %v1448
  %v1785 = vpack.c.b16 %v1456, %v1449
  %v1786 = vpack.c.b16 %v1457, %v1450
  %v1787 = vpack.c.b16 %v1465, %v1458
  %v1788 = vpack.c.b16 %v1466, %v1459
  %v1789 = vpack.c.b16 %v1467, %v1460
  %v1790 = vpack.c.b16 %v1468, %v1461
  %v1791 = vpack.c.b16 %v1469, %v1462
  %v1792 = vpack.c.b16 %v1470, %v1463
  %v1793 = vpack.c.b16 %v1471, %v1464
  %v1794 = vpack.c.b16 %v1479, %v1472
  %v1795 = vpack.c.b16 %v1480, %v1473
  %v1796 = vpack.c.b16 %v1481, %v1474
  %v1797 = vpack.c.b16 %v1482, %v1475
  %v1798 = vpack.c.b16 %v1483, %v1476
  %v1799 = vpack.c.b16 %v1484, %v1477
  %v1800 = vpack.c.b16 %v1485, %v1478
  %v1801 = vpack.c.b16 %v1493, %v1486
  %v1802 = vpack.c.b16 %v1494, %v1487
  %v1803 = vpack.c.b16 %v1495, %v1488
  %v1804 = vpack.c.b16 %v1496, %v1489
  %v1805 = vpack.c.b16 %v1497, %v1490
  %v1806 = vpack.c.b16 %v1498, %v1491
  %v1807 = vpack.c.b16 %v1499, %v1492
  %v1808 = vpack.c.b16 %v1507, %v1500
  %v1809 = vpack.c.b16 %v1508, %v1501
  %v1810 = vpack.c.b16 %v1509, %v1502
  %v1811 = vpack.c.b16 %v1510, %v1503
  %v1812 = vpack.c.b16 %v1511, %v1504
  %v1813 = vpack.c.b16 %v1512, %v1505
  %v1814 = vpack.c.b16 %v1513, %v1506
  %v1815 = vpack.c.b16 %v1521, %v1514
  %v1816 = vpack.c.b16 %v1522, %v1515
  %v1817 = vpack.c.b16 %v1523, %v1516
  %v1818 = vpack.c.b16 %v1524, %v1517
  %v1819 = vpack.c.b16 %v1525, %v1518
  %v1820 = vpack.c.b16 %v1526, %v1519
  %v1821 = vpack.c.b16 %v1527, %v1520
  %v1822 = vpack.c.b16 %v1535, %v1528
  %v1823 = vpack.c.b16 %v1536, %v1529
  %v1824 = vpack.c.b16 %v1537, %v1530
  %v1825 = vpack.c.b16 %v1538, %v1531
  %v1826 = vpack.c.b16 %v1539, %v1532
  %v1827 = vpack.c.b16 %v1540, %v1533
  %v1828 = vpack.c.b16 %v1541, %v1534
  %v1829 = vpack.c.b16 %v1549, %v1542
  %v1830 = vpack.c.b16 %v1550, %v1543
  %v1831 = vpack.c.b16 %v1551, %v1544
  %v1832 = vpack.c.b16 %v1552, %v1545
  %v1833 = vpack.c.b16 %v1553, %v1546
  %v1834 = vpack.c.b16 %v1554, %v1547
  %v1835 = vpack.c.b16 %v1555, %v1548
  %v1836 = vpack.c.b16 %v1563, %v1556
  %v1837 = vpack.c.b16 %v1564, %v1557
  %v1838 = vpack.c.b16 %v1565, %v1558
  %v1839 = vpack.c.b16 %v1566, %v1559
  %v1840 = vpack.c.b16 %v1567, %v1560
  %v1841 = vpack.c.b16 %v1568, %v1561
  %v1842 = vpack.c.b16 %v1569, %v1562
  %v1843 = vpack.c.b16 %v1577, %v1570
  %v1844 = vpack.c.b16 %v1578, %v1571
  %v1845 = vpack.c.b16 %v1579, %v1572
  %v1846 = vpack.c.b16 %v1580, %v1573
  %v1847 = vpack.c.b16 %v1581, %v1574
  %v1848 = vpack.c.b16 %v1582, %v1575
  %v1849 = vpack.c.b16 %v1583, %v1576
  %v1850 = vpack.c.b16 %v1591, %v1584
  %v1851 = vpack.c.b16 %v1592, %v1585
  %v1852 = vpack.c.b16 %v1593, %v1586
  %v1853 = vpack.c.b16 %v1594, %v1587
  %v1854 = vpack.c.b16 %v1595, %v1588
  %v1855 = vpack.c.b16 %v1596, %v1589
  %v1856 = vpack.c.b16 %v1597, %v1590
  %v1857 = vpack.c.b16 %v1605, %v1598
  %v1858 = vpack.c.b16 %v1606, %v1599
  %v1859 = vpack.c.b16 %v1607, %v1600
  %v1860 = vpack.c.b16 %v1608, %v1601
  %v1861 = vpack.c.b16 %v1609, %v1602
  %v1862 = vpack.c.b16 %v1610, %v1603
  %v1863 = vpack.c.b16 %v1611, %v1604
  %v1864 = vpack.c.b16 %v1619, %v1612
  %v1865 = vpack.c.b16 %v1620, %v1613
  %v1866 = vpack.c.b16 %v1621, %v1614
  %v1867 = vpack.c.b16 %v1622, %v1615
  %v1868 = vpack.c.b16 %v1623, %v1616
  %v1869 = vpack.c.b16 %v1624, %v1617
  %v1870 = vpack.c.b16 %v1625, %v1618
  %v1871 = vpack.c.b16 %v1633, %v1626
  %v1872 = vpack.c.b16 %v1634, %v1627
  %v1873 = vpack.c.b16 %v1635, %v1628
  %v1874 = vpack.c.b16 %v1636, %v1629
  %v1875 = vpack.c.b16 %v1637, %v1630
  %v1876 = vpack.c.b16 %v1638, %v1631
  %v1877 = vpack.c.b16 %v1639, %v1632
  %v1878 = vpack.c.b16 %v1647, %v1640
  %v1879 = vpack.c.b16 %v1648, %v1641
  %v1880 = vpack.c.b16 %v1649, %v1642
  %v1881 = vpack.c.b16 %v1650, %v1643
  %v1882 = vpack.c.b16 %v1651, %v1644
  %v1883 = vpack.c.b16 %v1652, %v1645
  %v1884 = vpack.c.b16 %v1653, %v1646
  %v1885 = vpack.c.b16 %v1661, %v1654
  %v1886 = vpack.c.b16 %v1662, %v1655
  %v1887 = vpack.c.b16 %v1663, %v1656
  %v1888 = vpack.c.b16 %v1664, %v1657
  %v1889 = vpack.c.b16 %v1665, %v1658
  %v1890 = vpack.c.b16 %v1666, %v1659
  %v1891 = vpack.c.b16 %v1667, %v1660
  %2116 = vmatprep.subr.bf16.mxu0 %v1669
  %2117 = vmatpush1.bf16.msra.mxu0 %v1668
  %2118 = vmatprep.subr.bf16.mxu0 %v1676
  %2119 = vmatpush1.bf16.msra.mxu0 %v1675
  %2120 = vmatprep.subr.bf16.mxu0 %v1683
  %2121 = vmatpush1.bf16.msra.mxu0 %v1682
  %2122 = vmatprep.subr.bf16.mxu0 %v1690
  %2123 = vmatpush1.bf16.msra.mxu0 %v1689
  %2124 = vmatprep.subr.bf16.mxu0 %v1697
  %2125 = vmatpush1.bf16.msra.mxu0 %v1696
  %2126 = vmatprep.subr.bf16.mxu0 %v1704
  %2127 = vmatpush1.bf16.msra.mxu0 %v1703
  %2128 = vmatprep.subr.bf16.mxu0 %v1711
  %2129 = vmatpush1.bf16.msra.mxu0 %v1710
  %2130 = vmatprep.subr.bf16.mxu0 %v1718
  %2131 = vmatpush1.bf16.msra.mxu0 %v1717
  %2132 = vmatprep.subr.bf16.mxu0 %v1725
  %2133 = vmatpush1.bf16.msra.mxu0 %v1724
  %2134 = vmatprep.subr.bf16.mxu0 %v1732
  %2135 = vmatpush1.bf16.msra.mxu0 %v1731
  %2136 = vmatprep.subr.bf16.mxu0 %v1739
  %2137 = vmatpush1.bf16.msra.mxu0 %v1738
  %2138 = vmatprep.subr.bf16.mxu0 %v1746
  %2139 = vmatpush1.bf16.msra.mxu0 %v1745
  %2140 = vmatprep.subr.bf16.mxu0 %v1753
  %2141 = vmatpush1.bf16.msra.mxu0 %v1752
  %2142 = vmatprep.subr.bf16.mxu0 %v1760
  %2143 = vmatpush1.bf16.msra.mxu0 %v1759
  %2144 = vmatprep.subr.bf16.mxu0 %v1767
  %2145 = vmatpush1.bf16.msra.mxu0 %v1766
  %2146 = vmatprep.subr.bf16.mxu0 %v1774
  %2147 = vmatpush1.bf16.msra.mxu0 %v1773
  %2148 = vmatprep.mubr.bf16.mxu0 %v668
  %2149 = vmatmul.mubr.bf16.gmra.mrb[0].mxu0 %v667
  %v2150 = vpop.f32.mrb[0].mxu0
  %v2151 = vadd.f32 %v932, %v2150
  %v2152 = vpop.f32.mrb[0].mxu0
  %v2153 = vadd.f32 %v936, %v2152
  %v2154 = vpop.f32.mrb[0].mxu0
  %v2155 = vpop.f32.mrb[0].mxu0
  %2156 = vdwg.mxu0
  %2157 = vmatprep.subr.bf16.mxu0 %v1781
  %2158 = vmatpush1.bf16.msra.mxu0 %v1780
  %2159 = vmatprep.subr.bf16.mxu0 %v1788
  %2160 = vmatpush1.bf16.msra.mxu0 %v1787
  %2161 = vmatprep.subr.bf16.mxu0 %v1795
  %2162 = vmatpush1.bf16.msra.mxu0 %v1794
  %2163 = vmatprep.subr.bf16.mxu0 %v1802
  %2164 = vmatpush1.bf16.msra.mxu0 %v1801
  %2165 = vmatprep.subr.bf16.mxu0 %v1809
  %2166 = vmatpush1.bf16.msra.mxu0 %v1808
  %2167 = vmatprep.subr.bf16.mxu0 %v1816
  %2168 = vmatpush1.bf16.msra.mxu0 %v1815
  %2169 = vmatprep.subr.bf16.mxu0 %v1823
  %2170 = vmatpush1.bf16.msra.mxu0 %v1822
  %2171 = vmatprep.subr.bf16.mxu0 %v1830
  %2172 = vmatpush1.bf16.msra.mxu0 %v1829
  %2173 = vmatprep.subr.bf16.mxu0 %v1837
  %2174 = vmatpush1.bf16.msra.mxu0 %v1836
  %2175 = vmatprep.subr.bf16.mxu0 %v1844
  %2176 = vmatpush1.bf16.msra.mxu0 %v1843
  %2177 = vmatprep.subr.bf16.mxu0 %v1851
  %2178 = vmatpush1.bf16.msra.mxu0 %v1850
  %2179 = vmatprep.subr.bf16.mxu0 %v1858
  %2180 = vmatpush1.bf16.msra.mxu0 %v1857
  %2181 = vmatprep.subr.bf16.mxu0 %v1865
  %2182 = vmatpush1.bf16.msra.mxu0 %v1864
  %2183 = vmatprep.subr.bf16.mxu0 %v1872
  %2184 = vmatpush1.bf16.msra.mxu0 %v1871
  %2185 = vmatprep.subr.bf16.mxu0 %v1879
  %2186 = vmatpush1.bf16.msra.mxu0 %v1878
  %2187 = vmatprep.subr.bf16.mxu0 %v1886
  %2188 = vmatpush1.bf16.msra.mxu0 %v1885
  %2189 = vmatprep.mubr.bf16.mxu0 %v670
  %2190 = vmatmul.mubr.bf16.gmra.mrb[0].mxu0 %v669
  %v2191 = vpop.f32.mrb[0].mxu0
  %v2192 = vadd.f32 %v2151, %v2191
  %v2193 = vpop.f32.mrb[0].mxu0
  %v2194 = vadd.f32 %v2153, %v2193
  %v2195 = vpop.f32.mrb[0].mxu0
  %v2196 = vpop.f32.mrb[0].mxu0
  %2197 = vdwg.mxu0
  %2198 = vmatprep.subr.bf16.mxu0 %v1671
  %2199 = vmatpush1.bf16.msra.mxu0 %v1670
  %2200 = vmatprep.subr.bf16.mxu0 %v1678
  %2201 = vmatpush1.bf16.msra.mxu0 %v1677
  %2202 = vmatprep.subr.bf16.mxu0 %v1685
  %2203 = vmatpush1.bf16.msra.mxu0 %v1684
  %2204 = vmatprep.subr.bf16.mxu0 %v1692
  %2205 = vmatpush1.bf16.msra.mxu0 %v1691
  %2206 = vmatprep.subr.bf16.mxu0 %v1699
  %2207 = vmatpush1.bf16.msra.mxu0 %v1698
  %2208 = vmatprep.subr.bf16.mxu0 %v1706
  %2209 = vmatpush1.bf16.msra.mxu0 %v1705
  %2210 = vmatprep.subr.bf16.mxu0 %v1713
  %2211 = vmatpush1.bf16.msra.mxu0 %v1712
  %2212 = vmatprep.subr.bf16.mxu0 %v1720
  %2213 = vmatpush1.bf16.msra.mxu0 %v1719
  %2214 = vmatprep.subr.bf16.mxu0 %v1727
  %2215 = vmatpush1.bf16.msra.mxu0 %v1726
  %2216 = vmatprep.subr.bf16.mxu0 %v1734
  %2217 = vmatpush1.bf16.msra.mxu0 %v1733
  %2218 = vmatprep.subr.bf16.mxu0 %v1741
  %2219 = vmatpush1.bf16.msra.mxu0 %v1740
  %2220 = vmatprep.subr.bf16.mxu0 %v1748
  %2221 = vmatpush1.bf16.msra.mxu0 %v1747
  %2222 = vmatprep.subr.bf16.mxu0 %v1755
  %2223 = vmatpush1.bf16.msra.mxu0 %v1754
  %2224 = vmatprep.subr.bf16.mxu0 %v1762
  %2225 = vmatpush1.bf16.msra.mxu0 %v1761
  %2226 = vmatprep.subr.bf16.mxu0 %v1769
  %2227 = vmatpush1.bf16.msra.mxu0 %v1768
  %2228 = vmatprep.subr.bf16.mxu0 %v1776
  %2229 = vmatpush1.bf16.msra.mxu0 %v1775
  %2230 = vmatprep.mubr.bf16.mxu0 %v668
  %2231 = vmatmul.mubr.bf16.gmra.mrb[0].mxu0 %v667
  %v2232 = vpop.f32.mrb[0].mxu0
  %v2233 = vadd.f32 %v940, %v2232
  %v2234 = vpop.f32.mrb[0].mxu0
  %v2235 = vadd.f32 %v944, %v2234
  %v2236 = vpop.f32.mrb[0].mxu0
  %v2237 = vpop.f32.mrb[0].mxu0
  %2238 = vdwg.mxu0
  %2239 = vmatprep.subr.bf16.mxu0 %v1783
  %2240 = vmatpush1.bf16.msra.mxu0 %v1782
  %2241 = vmatprep.subr.bf16.mxu0 %v1790
  %2242 = vmatpush1.bf16.msra.mxu0 %v1789
  %2243 = vmatprep.subr.bf16.mxu0 %v1797
  %2244 = vmatpush1.bf16.msra.mxu0 %v1796
  %2245 = vmatprep.subr.bf16.mxu0 %v1804
  %2246 = vmatpush1.bf16.msra.mxu0 %v1803
  %2247 = vmatprep.subr.bf16.mxu0 %v1811
  %2248 = vmatpush1.bf16.msra.mxu0 %v1810
  %2249 = vmatprep.subr.bf16.mxu0 %v1818
  %2250 = vmatpush1.bf16.msra.mxu0 %v1817
  %2251 = vmatprep.subr.bf16.mxu0 %v1825
  %2252 = vmatpush1.bf16.msra.mxu0 %v1824
  %2253 = vmatprep.subr.bf16.mxu0 %v1832
  %2254 = vmatpush1.bf16.msra.mxu0 %v1831
  %2255 = vmatprep.subr.bf16.mxu0 %v1839
  %2256 = vmatpush1.bf16.msra.mxu0 %v1838
  %2257 = vmatprep.subr.bf16.mxu0 %v1846
  %2258 = vmatpush1.bf16.msra.mxu0 %v1845
  %2259 = vmatprep.subr.bf16.mxu0 %v1853
  %2260 = vmatpush1.bf16.msra.mxu0 %v1852
  %2261 = vmatprep.subr.bf16.mxu0 %v1860
  %2262 = vmatpush1.bf16.msra.mxu0 %v1859
  %2263 = vmatprep.subr.bf16.mxu0 %v1867
  %2264 = vmatpush1.bf16.msra.mxu0 %v1866
  %2265 = vmatprep.subr.bf16.mxu0 %v1874
  %2266 = vmatpush1.bf16.msra.mxu0 %v1873
  %2267 = vmatprep.subr.bf16.mxu0 %v1881
  %2268 = vmatpush1.bf16.msra.mxu0 %v1880
  %2269 = vmatprep.subr.bf16.mxu0 %v1888
  %2270 = vmatpush1.bf16.msra.mxu0 %v1887
  %2271 = vmatprep.mubr.bf16.mxu0 %v670
  %2272 = vmatmul.mubr.bf16.gmra.mrb[0].mxu0 %v669
  %v2273 = vpop.f32.mrb[0].mxu0
  %v2274 = vadd.f32 %v2233, %v2273
  %v2275 = vpop.f32.mrb[0].mxu0
  %v2276 = vadd.f32 %v2235, %v2275
  %v2277 = vpop.f32.mrb[0].mxu0
  %v2278 = vpop.f32.mrb[0].mxu0
  %2279 = vdwg.mxu0
  %2280 = vmatprep.subr.bf16.mxu0 %v1673
  %2281 = vmatpush1.bf16.msra.mxu0 %v1672
  %2282 = vmatprep.subr.bf16.mxu0 %v1680
  %2283 = vmatpush1.bf16.msra.mxu0 %v1679
  %2284 = vmatprep.subr.bf16.mxu0 %v1687
  %2285 = vmatpush1.bf16.msra.mxu0 %v1686
  %2286 = vmatprep.subr.bf16.mxu0 %v1694
  %2287 = vmatpush1.bf16.msra.mxu0 %v1693
  %2288 = vmatprep.subr.bf16.mxu0 %v1701
  %2289 = vmatpush1.bf16.msra.mxu0 %v1700
  %2290 = vmatprep.subr.bf16.mxu0 %v1708
  %2291 = vmatpush1.bf16.msra.mxu0 %v1707
  %2292 = vmatprep.subr.bf16.mxu0 %v1715
  %2293 = vmatpush1.bf16.msra.mxu0 %v1714
  %2294 = vmatprep.subr.bf16.mxu0 %v1722
  %2295 = vmatpush1.bf16.msra.mxu0 %v1721
  %2296 = vmatprep.subr.bf16.mxu0 %v1729
  %2297 = vmatpush1.bf16.msra.mxu0 %v1728
  %2298 = vmatprep.subr.bf16.mxu0 %v1736
  %2299 = vmatpush1.bf16.msra.mxu0 %v1735
  %2300 = vmatprep.subr.bf16.mxu0 %v1743
  %2301 = vmatpush1.bf16.msra.mxu0 %v1742
  %2302 = vmatprep.subr.bf16.mxu0 %v1750
  %2303 = vmatpush1.bf16.msra.mxu0 %v1749
  %2304 = vmatprep.subr.bf16.mxu0 %v1757
  %2305 = vmatpush1.bf16.msra.mxu0 %v1756
  %2306 = vmatprep.subr.bf16.mxu0 %v1764
  %2307 = vmatpush1.bf16.msra.mxu0 %v1763
  %2308 = vmatprep.subr.bf16.mxu0 %v1771
  %2309 = vmatpush1.bf16.msra.mxu0 %v1770
  %2310 = vmatprep.subr.bf16.mxu0 %v1778
  %2311 = vmatpush1.bf16.msra.mxu0 %v1777
  %2312 = vmatprep.mubr.bf16.mxu0 %v668
  %2313 = vmatmul.mubr.bf16.gmra.mrb[0].mxu0 %v667
  %v2314 = vpop.f32.mrb[0].mxu0
  %v2315 = vadd.f32 %v948, %v2314
  %v2316 = vpop.f32.mrb[0].mxu0
  %v2317 = vadd.f32 %v952, %v2316
  %v2318 = vpop.f32.mrb[0].mxu0
  %v2319 = vpop.f32.mrb[0].mxu0
  %2320 = vdwg.mxu0
  %2321 = vmatprep.subr.bf16.mxu0 %v1785
  %2322 = vmatpush1.bf16.msra.mxu0 %v1784
  %2323 = vmatprep.subr.bf16.mxu0 %v1792
  %2324 = vmatpush1.bf16.msra.mxu0 %v1791
  %2325 = vmatprep.subr.bf16.mxu0 %v1799
  %2326 = vmatpush1.bf16.msra.mxu0 %v1798
  %2327 = vmatprep.subr.bf16.mxu0 %v1806
  %2328 = vmatpush1.bf16.msra.mxu0 %v1805
  %2329 = vmatprep.subr.bf16.mxu0 %v1813
  %2330 = vmatpush1.bf16.msra.mxu0 %v1812
  %2331 = vmatprep.subr.bf16.mxu0 %v1820
  %2332 = vmatpush1.bf16.msra.mxu0 %v1819
  %2333 = vmatprep.subr.bf16.mxu0 %v1827
  %2334 = vmatpush1.bf16.msra.mxu0 %v1826
  %2335 = vmatprep.subr.bf16.mxu0 %v1834
  %2336 = vmatpush1.bf16.msra.mxu0 %v1833
  %2337 = vmatprep.subr.bf16.mxu0 %v1841
  %2338 = vmatpush1.bf16.msra.mxu0 %v1840
  %2339 = vmatprep.subr.bf16.mxu0 %v1848
  %2340 = vmatpush1.bf16.msra.mxu0 %v1847
  %2341 = vmatprep.subr.bf16.mxu0 %v1855
  %2342 = vmatpush1.bf16.msra.mxu0 %v1854
  %2343 = vmatprep.subr.bf16.mxu0 %v1862
  %2344 = vmatpush1.bf16.msra.mxu0 %v1861
  %2345 = vmatprep.subr.bf16.mxu0 %v1869
  %2346 = vmatpush1.bf16.msra.mxu0 %v1868
  %2347 = vmatprep.subr.bf16.mxu0 %v1876
  %2348 = vmatpush1.bf16.msra.mxu0 %v1875
  %2349 = vmatprep.subr.bf16.mxu0 %v1883
  %2350 = vmatpush1.bf16.msra.mxu0 %v1882
  %2351 = vmatprep.subr.bf16.mxu0 %v1890
  %2352 = vmatpush1.bf16.msra.mxu0 %v1889
  %2353 = vmatprep.mubr.bf16.mxu0 %v670
  %2354 = vmatmul.mubr.bf16.gmra.mrb[0].mxu0 %v669
  %v2355 = vpop.f32.mrb[0].mxu0
  %v2356 = vadd.f32 %v2315, %v2355
  %v2357 = vpop.f32.mrb[0].mxu0
  %v2358 = vadd.f32 %v2317, %v2357
  %v2359 = vpop.f32.mrb[0].mxu0
  %v2360 = vpop.f32.mrb[0].mxu0
  %2361 = vdwg.mxu0
  %2362 = vmatprep.subr.bf16.mxu0 0
  %2363 = vmatpush1.bf16.msra.mxu0 %v1674
  %2364 = vmatprep.subr.bf16.mxu0 0
  %2365 = vmatpush1.bf16.msra.mxu0 %v1681
  %2366 = vmatprep.subr.bf16.mxu0 0
  %2367 = vmatpush1.bf16.msra.mxu0 %v1688
  %2368 = vmatprep.subr.bf16.mxu0 0
  %2369 = vmatpush1.bf16.msra.mxu0 %v1695
  %2370 = vmatprep.subr.bf16.mxu0 0
  %2371 = vmatpush1.bf16.msra.mxu0 %v1702
  %2372 = vmatprep.subr.bf16.mxu0 0
  %2373 = vmatpush1.bf16.msra.mxu0 %v1709
  %2374 = vmatprep.subr.bf16.mxu0 0
  %2375 = vmatpush1.bf16.msra.mxu0 %v1716
  %2376 = vmatprep.subr.bf16.mxu0 0
  %2377 = vmatpush1.bf16.msra.mxu0 %v1723
  %2378 = vmatprep.subr.bf16.mxu0 0
  %2379 = vmatpush1.bf16.msra.mxu0 %v1730
  %2380 = vmatprep.subr.bf16.mxu0 0
  %2381 = vmatpush1.bf16.msra.mxu0 %v1737
  %2382 = vmatprep.subr.bf16.mxu0 0
  %2383 = vmatpush1.bf16.msra.mxu0 %v1744
  %2384 = vmatprep.subr.bf16.mxu0 0
  %2385 = vmatpush1.bf16.msra.mxu0 %v1751
  %2386 = vmatprep.subr.bf16.mxu0 0
  %2387 = vmatpush1.bf16.msra.mxu0 %v1758
  %2388 = vmatprep.subr.bf16.mxu0 0
  %2389 = vmatpush1.bf16.msra.mxu0 %v1765
  %2390 = vmatprep.subr.bf16.mxu0 0
  %2391 = vmatpush1.bf16.msra.mxu0 %v1772
  %2392 = vmatprep.subr.bf16.mxu0 0
  %2393 = vmatpush1.bf16.msra.mxu0 %v1779
  %2394 = vmatprep.mubr.bf16.mxu0 %v668
  %2395 = vmatmul.mubr.bf16.gmra.mrb[0].mxu0 %v667
  %v2396 = vpop.f32.mrb[0].mxu0
  %v2397 = vadd.f32 %v956, %v2396
  %v2398 = vpop.f32.mrb[0].mxu0
  %v2399 = vpop.f32.mrb[0].mxu0
  %v2400 = vpop.f32.mrb[0].mxu0
  %2401 = vdwg.mxu0
  %2402 = vmatprep.subr.bf16.mxu0 0
  %2403 = vmatpush1.bf16.msra.mxu0 %v1786
  %2404 = vmatprep.subr.bf16.mxu0 0
  %2405 = vmatpush1.bf16.msra.mxu0 %v1793
  %2406 = vmatprep.subr.bf16.mxu0 0
  %2407 = vmatpush1.bf16.msra.mxu0 %v1800
  %2408 = vmatprep.subr.bf16.mxu0 0
  %2409 = vmatpush1.bf16.msra.mxu0 %v1807
  %2410 = vmatprep.subr.bf16.mxu0 0
  %2411 = vmatpush1.bf16.msra.mxu0 %v1814
  %2412 = vmatprep.subr.bf16.mxu0 0
  %2413 = vmatpush1.bf16.msra.mxu0 %v1821
  %2414 = vmatprep.subr.bf16.mxu0 0
  %2415 = vmatpush1.bf16.msra.mxu0 %v1828
  %2416 = vmatprep.subr.bf16.mxu0 0
  %2417 = vmatpush1.bf16.msra.mxu0 %v1835
  %2418 = vmatprep.subr.bf16.mxu0 0
  %2419 = vmatpush1.bf16.msra.mxu0 %v1842
  %2420 = vmatprep.subr.bf16.mxu0 0
  %2421 = vmatpush1.bf16.msra.mxu0 %v1849
  %2422 = vmatprep.subr.bf16.mxu0 0
  %2423 = vmatpush1.bf16.msra.mxu0 %v1856
  %2424 = vmatprep.subr.bf16.mxu0 0
  %2425 = vmatpush1.bf16.msra.mxu0 %v1863
  %2426 = vmatprep.subr.bf16.mxu0 0
  %2427 = vmatpush1.bf16.msra.mxu0 %v1870
  %2428 = vmatprep.subr.bf16.mxu0 0
  %2429 = vmatpush1.bf16.msra.mxu0 %v1877
  %2430 = vmatprep.subr.bf16.mxu0 0
  %2431 = vmatpush1.bf16.msra.mxu0 %v1884
  %2432 = vmatprep.subr.bf16.mxu0 0
  %2433 = vmatpush1.bf16.msra.mxu0 %v1891
  %2434 = vmatprep.mubr.bf16.mxu0 %v670
  %2435 = vmatmul.mubr.bf16.gmra.mrb[0].mxu0 %v669
  %v2436 = vpop.f32.mrb[0].mxu0
  %v2437 = vadd.f32 %v2397, %v2436
  %v2438 = vpop.f32.mrb[0].mxu0
  %v2439 = vpop.f32.mrb[0].mxu0
  %v2440 = vpop.f32.mrb[0].mxu0
  %2441 = vdwg.mxu0
  %v2442 = vtanh.pop %v2192
  %v2443 = vtanh.pop %v2194
  %v2444 = vtanh.pop %v2274
  %v2445 = vtanh.pop %v2276
  %v2446 = vtanh.pop %v2356
  %v2447 = vtanh.pop %v2358
  %v2448 = vtanh.pop %v2437
  %2449 = vst [vmem:[%s7] sm:$0xff] %v2442
  %2450 = vst [vmem:[%s7 + $0x8] sm:$0xff] %v2443
  %2451 = vst [vmem:[%s7 + $0x10] sm:$0xff] %v2444
  %2452 = vst [vmem:[%s7 + $0x18] sm:$0xff] %v2445
  %2453 = vst [vmem:[%s7 + $0x20] sm:$0xff] %v2446
  %2454 = vst [vmem:[%s7 + $0x28] sm:$0xff] %v2447
  %vm2455 = vcmask 130048
  %2456 = vst.msk [vmem:[%s7 + $0x30] sm:$0xff] %vm2455, %v2448
  // Predicated region
  $region30: #{generator_forward.1} parent=0 // pred_check
    _
  $region31: #{generator_forward.1} parent=0 // pred_check_branch
    %2458 = sbr.rel (0) target = $region33
  $region32: #{generator_forward.1} parent=0 // pred_region
    _
  $region33: #{generator_forward.1} parent=0 // pred_fallthru
    _
  // Predicated region
  $region34: #{generator_forward.1} parent=0 // pred_check
    _
  $region35: #{generator_forward.1} parent=0 // pred_check_branch
    %2460 = sbr.rel (0) target = $region37
  $region36: #{generator_forward.1} parent=0 // pred_region
    _
  $region37: #{generator_forward.1} parent=0 // pred_fallthru
    _

</llo_original>
